<compile_context>
chip_gen: v6e
topology: v6e:2x2x1
jax: 0.10.0
libtpu: 0.0.40
codegen_flags: <defaults>
</compile_context>

<pallas_src>
import functools

import jax
import jax.numpy as jnp
from jax.experimental import pallas as pl
from jax.experimental.pallas import tpu as pltpu


# ----------------------------------------------------------------------------
# Rotary tables (rotary_embedding_torch convention: interleaved pairs).
# ----------------------------------------------------------------------------
def rotary_tables(seq_len, dim_head, theta=10000.0):
    inv_freq = 1.0 / (theta ** (jnp.arange(0, dim_head, 2, dtype=jnp.float32) / dim_head))
    pos = jnp.arange(seq_len, dtype=jnp.float32)
    ang = pos[:, None] * inv_freq[None, :]                # (N, dh/2)
    ang = jnp.repeat(ang, 2, axis=-1)                     # (N, dh): pairs share a freq
    return jnp.cos(ang), jnp.sin(ang)


def rotate_half_matrix(dim_head):
    # y = x @ R  with  y[2i] = -x[2i+1], y[2i+1] = x[2i]  (interleaved rot_half).
    k_idx = jnp.arange(dim_head)[:, None]
    j_idx = jnp.arange(dim_head)[None, :]
    r = jnp.where((j_idx % 2 == 0) & (k_idx == j_idx + 1), -1.0,
                  jnp.where((j_idx % 2 == 1) & (k_idx == j_idx - 1), 1.0, 0.0))
    return r.astype(jnp.float32)


def _round_up(n, m):
    return ((n + m - 1) // m) * m


def _preferred_tile():
    # v5e: 4x128x128 MXU + lower HBM BW -> 128 tiles; v6e/v7x: 256x256 MXU -> 256.
    try:
        kind = jax.devices()[0].device_kind.lower()
    except Exception:
        return 256
    if "v5 lite" in kind or "v5e" in kind or "v5lite" in kind:
        return 128
    return 256


# ----------------------------------------------------------------------------
# Kernel 1: RMSNorm + qkv projection + rotary + head-major writeback.
# ----------------------------------------------------------------------------
def proj_rotary_kernel(x_ref, gamma_ref, wqkv_ref, rot_ref, cos_ref, sin_ref,
                       qrot_ref, krot_ref, vbf_ref, kcache_ref, vcache_ref,
                       *, heads, dim_head, scale):
    ts, D = x_ref.shape[1], x_ref.shape[2]
    di = heads * dim_head

    x = x_ref[0]                                          # (ts, D) f32
    gamma = gamma_ref[...]                                # (1, D)

    # RMSNorm: F.normalize(x, dim=-1) * sqrt(D) * gamma   (rsqrt -> EUP)
    ss = jnp.sum(x * x, axis=-1, keepdims=True)
    xn = x * jax.lax.rsqrt(jnp.maximum(ss, 1e-24)) * (D ** 0.5) * gamma

    # qkv projection: bf16 operands, f32 accumulation on the MXU.
    qkv = jnp.dot(xn.astype(jnp.bfloat16), wqkv_ref[...],
                  preferred_element_type=jnp.float32)     # (ts, 3*di) f32

    q = qkv[:, :di] * scale            # scaling before rotation == after (linear)
    k = qkv[:, di:2 * di]
    v = qkv[:, 2 * di:]

    cos = cos_ref[...]                                    # (ts, dh)
    sin = sin_ref[...]                                    # (ts, dh)
    rot = rot_ref[...]                                    # (dh, dh) +/-1 permutation

    # Per-head rotary + head-major writeback (static small unroll).
    for h in range(heads):
        sl = slice(h * dim_head, (h + 1) * dim_head)
        q_h = q[:, sl]
        k_h = k[:, sl]
        v_h = v[:, sl]
        q_rot = q_h * cos + jnp.dot(q_h, rot, preferred_element_type=jnp.float32) * sin
        k_rot = k_h * cos + jnp.dot(k_h, rot, preferred_element_type=jnp.float32) * sin
        qrot_ref[0, h] = q_rot.astype(jnp.bfloat16)
        krot_ref[0, h] = k_rot.astype(jnp.bfloat16)
        vbf_ref[0, h] = v_h.astype(jnp.bfloat16)          # bf16 V for attention
        kcache_ref[0, h] = k_h                            # f32 unrotated cache
        vcache_ref[0, h] = v_h


# ----------------------------------------------------------------------------
# Kernel 2: flash attention (all heads batched) + fused output projection.
# Grid: (batch, q-tiles, kv-tiles).  kv tiles above the diagonal are skipped
# (no compute) and their K/V DMAs are avoided by clamping the kv block index.
# ----------------------------------------------------------------------------
def flash_attn_kernel(q_ref, k_ref, v_ref, wout_ref, o_ref,
                      m_sc, l_sc, acc_sc):
    qi = pl.program_id(1)
    ki = pl.program_id(2)

    heads, tq, dh = q_ref.shape[1], q_ref.shape[2], q_ref.shape[3]
    tk = k_ref.shape[2]
    D = wout_ref.shape[2]

    @pl.when(ki == 0)
    def _():
        m_sc[...] = jnp.full(m_sc.shape, -jnp.inf, jnp.float32)
        l_sc[...] = jnp.zeros(l_sc.shape, jnp.float32)
        acc_sc[...] = jnp.zeros(acc_sc.shape, jnp.float32)

    def update(masked):
        q = q_ref[0]                                      # (heads, tq, dh) bf16
        k = k_ref[0]                                      # (heads, tk, dh) bf16
        v = v_ref[0]                                      # (heads, tk, dh) bf16

        # Scores for all heads in one batched MXU op.
        s = jnp.einsum('hqd,hkd->hqk', q, k,
                       preferred_element_type=jnp.float32)   # (heads, tq, tk)
        if masked:
            # Diagonal tile only (tq == tk => relative indices suffice).
            row = jax.lax.broadcasted_iota(jnp.int32, (tq, tk), 0)
            col = jax.lax.broadcasted_iota(jnp.int32, (tq, tk), 1)
            s = jnp.where((col > row)[None, :, :], -1e30, s)  # finite sentinel

        m_prev = m_sc[...]
        m_new = jnp.maximum(m_prev, jnp.max(s, axis=-1, keepdims=True))
        alpha = jnp.exp(m_prev - m_new)
        p = jnp.exp(s - m_new)
        l_sc[...] = alpha * l_sc[...] + jnp.sum(p, axis=-1, keepdims=True)
        pv = jnp.einsum('hqk,hkd->hqd', p.astype(jnp.bfloat16), v,
                        preferred_element_type=jnp.float32)   # (heads, tq, dh)
        acc_sc[...] = alpha * acc_sc[...] + pv
        m_sc[...] = m_new

    @pl.when(ki < qi)                 # strictly below diagonal: no mask needed
    def _():
        update(masked=False)

    @pl.when(ki == qi)                # diagonal tile: mask + finalize
    def _():
        update(masked=True)
        # Softmax normalization, then per-head accumulated output projection
        # (no head->lane concatenate relayout).
        o = acc_sc[...] * (1.0 / l_sc[...])                # (heads, tq, dh) f32
        acc = jnp.zeros((tq, D), jnp.float32)
        for h in range(heads):
            acc = acc + jnp.dot(o[h].astype(jnp.bfloat16), wout_ref[h],
                                preferred_element_type=jnp.float32)
        o_ref[0] = acc
    # ki > qi: nothing runs; K/V index_maps are clamped so no new DMA happens.


# ----------------------------------------------------------------------------
# Wrapper
# ----------------------------------------------------------------------------
def causal_attention_forward(x, params, *, heads, dim_head):
    B, N, D = x.shape
    di = heads * dim_head
    scale = dim_head ** -0.5

    tile_pref = _preferred_tile()
    tile = tile_pref if N >= tile_pref else _round_up(N, 8)
    N_pad = _round_up(N, tile)

    x_p = x.astype(jnp.float32)
    if N_pad != N:
        # Padded key positions are after every real query position, so the
        # causal mask hides them; padded query rows are sliced off below.
        x_p = jnp.pad(x_p, ((0, 0), (0, N_pad - N), (0, 0)))

    gamma = params["gamma"].reshape(1, D).astype(jnp.float32)
    wqkv_bf = params["wqkv"].astype(jnp.bfloat16)                       # (D, 3*di)
    wout_r = params["wout"].reshape(heads, dim_head, D).astype(jnp.bfloat16)
    cos, sin = rotary_tables(N_pad, dim_head)                           # (N_pad, dh)
    rot_mat = rotate_half_matrix(dim_head)                              # (dh, dh)

    vmem_limit = 32 * 1024 * 1024   # safe on v7x's 64 MiB, <= default on v6e

    # --- Kernel 1: RMSNorm + qkv projection + rotary ------------------------
    head_block = pl.BlockSpec((1, heads, tile, dim_head), lambda b, s: (b, 0, s, 0))
    q_rot, k_rot, v_bf, k_cache, v_cache = pl.pallas_call(
        functools.partial(proj_rotary_kernel, heads=heads, dim_head=dim_head,
                          scale=scale),
        out_shape=(
            jax.ShapeDtypeStruct((B, heads, N_pad, dim_head), jnp.bfloat16),  # q_rot
            jax.ShapeDtypeStruct((B, heads, N_pad, dim_head), jnp.bfloat16),  # k_rot
            jax.ShapeDtypeStruct((B, heads, N_pad, dim_head), jnp.bfloat16),  # v (attn)
            jax.ShapeDtypeStruct((B, heads, N_pad, dim_head), jnp.float32),   # k cache
            jax.ShapeDtypeStruct((B, heads, N_pad, dim_head), jnp.float32),   # v cache
        ),
        grid=(B, N_pad // tile),
        in_specs=[
            pl.BlockSpec((1, tile, D), lambda b, s: (b, s, 0)),
            pl.BlockSpec((1, D), lambda b, s: (0, 0)),
            pl.BlockSpec((D, 3 * di), lambda b, s: (0, 0)),
            pl.BlockSpec((dim_head, dim_head), lambda b, s: (0, 0)),
            pl.BlockSpec((tile, dim_head), lambda b, s: (s, 0)),
            pl.BlockSpec((tile, dim_head), lambda b, s: (s, 0)),
        ],
        out_specs=(head_block, head_block, head_block, head_block, head_block),
        compiler_params=pltpu.CompilerParams(
            dimension_semantics=("parallel", "parallel"),
            vmem_limit_bytes=vmem_limit),
    )(x_p, gamma, wqkv_bf, rot_mat, cos, sin)

    # --- Kernel 2: flash attention + output projection ----------------------
    n_t = N_pad // tile
    out_p = pl.pallas_call(
        flash_attn_kernel,
        out_shape=jax.ShapeDtypeStruct((B, N_pad, D), jnp.float32),
        grid=(B, n_t, n_t),
        in_specs=[
            pl.BlockSpec((1, heads, tile, dim_head),
                         lambda b, qi, ki: (b, 0, qi, 0)),
            # Clamp kv block index: above-diagonal steps reuse the resident
            # block (no DMA); their compute is skipped in-kernel.
            pl.BlockSpec((1, heads, tile, dim_head),
                         lambda b, qi, ki: (b, 0, jnp.minimum(ki, qi), 0)),
            pl.BlockSpec((1, heads, tile, dim_head),
                         lambda b, qi, ki: (b, 0, jnp.minimum(ki, qi), 0)),
            pl.BlockSpec((heads, dim_head, D), lambda b, qi, ki: (0, 0, 0)),
        ],
        out_specs=pl.BlockSpec((1, tile, D), lambda b, qi, ki: (b, qi, 0)),
        scratch_shapes=[
            pltpu.VMEM((heads, tile, 1), jnp.float32),            # running max
            pltpu.VMEM((heads, tile, 1), jnp.float32),            # running denom
            pltpu.VMEM((heads, tile, dim_head), jnp.float32),     # output accumulator
        ],
        compiler_params=pltpu.CompilerParams(
            dimension_semantics=("parallel", "parallel", "arbitrary"),
            vmem_limit_bytes=vmem_limit),
    )(q_rot, k_rot, v_bf, wout_r)

    out = out_p[:, :N]
    cached_kv = jnp.stack((k_cache[:, :, :N], v_cache[:, :, :N]))  # (2,B,H,N,dh)
    return out, cached_kv, None


# ----------------------------------------------------------------------------
# Pure-JAX reference mirroring the PyTorch module (sanity check).
# ----------------------------------------------------------------------------
def reference_forward(x, params, *, heads, dim_head):
    B, N, D = x.shape
    di = heads * dim_head
    scale = dim_head ** -0.5
    gamma = params["gamma"]

    l2 = jnp.maximum(jnp.linalg.norm(x, axis=-1, keepdims=True), 1e-12)
    xn = x / l2 * (D ** 0.5) * gamma
    qkv = jnp.einsum("bnd,de->bne", xn, params["wqkv"], precision="highest")
    qkv = qkv.reshape(B, N, 3, heads, dim_head)
    q = jnp.transpose(qkv[:, :, 0], (0, 2, 1, 3))
    k = jnp.transpose(qkv[:, :, 1], (0, 2, 1, 3))
    v = jnp.transpose(qkv[:, :, 2], (0, 2, 1, 3))

    cos, sin = rotary_tables(N, dim_head)
    half = dim_head // 2

    def rot_half(t):
        t2 = t.reshape(*t.shape[:-1], half, 2)
        return jnp.stack((-t2[..., 1], t2[..., 0]), axis=-1).reshape(t.shape)

    qs = q * scale
    q_rot = qs * cos + rot_half(qs) * sin
    k_rot = k * cos + rot_half(k) * sin

    sim = jnp.einsum("bhid,bhjd->bhij", q_rot, k_rot, precision="highest")
    mask = jnp.triu(jnp.ones((N, N), bool), 1)
    sim = jnp.where(mask, -jnp.finfo(jnp.float32).max, sim)
    attn = jax.nn.softmax(sim, axis=-1)
    o = jnp.einsum("bhij,bhjd->bhid", attn, v, precision="highest")
    o = jnp.transpose(o, (0, 2, 1, 3)).reshape(B, N, di)
    out = jnp.einsum("bnd,de->bne", o, params["wout"], precision="highest")
    return out, jnp.stack((k, v)), None


if __name__ == "__main__":
    # Small shapes consistent with the module.
    B, N, D = 2, 8, 32
    heads, dim_head = 2, 16
    di = heads * dim_head

    key = jax.random.PRNGKey(0)
    kx, kq, ko = jax.random.split(key, 3)

    x = jax.random.normal(kx, (B, N, D), dtype=jnp.float32)

    params = {
        "gamma": jnp.ones((D,), jnp.float32),
        "wqkv": jax.random.uniform(kq, (D, 3 * di), jnp.float32,
                                   minval=-1.0 / (D ** 0.5), maxval=1.0 / (D ** 0.5)),
        "wout": jax.random.uniform(ko, (di, D), jnp.float32,
                                   minval=-1.0 / (di ** 0.5), maxval=1.0 / (di ** 0.5)),
        # head_gates exist in the module but are unused when past_memories is None.
    }

    out, cached_kv, past_mem = causal_attention_forward(x, params, heads=heads,
                                                        dim_head=dim_head)
    jax.block_until_ready(out)
    jax.block_until_ready(cached_kv)

    ref_out, ref_kv, _ = reference_forward(x, params, heads=heads, dim_head=dim_head)
    assert out.shape == (B, N, D)
    assert cached_kv.shape == (2, B, heads, N, dim_head)
    assert past_mem is None
    # bf16 MXU operands -> slightly looser tolerance than pure f32.
    assert jnp.allclose(out, ref_out, atol=5e-2, rtol=5e-2)
    assert jnp.allclose(cached_kv, ref_kv, atol=5e-2, rtol=5e-2)

    print("KERNEL_OK")
</pallas_src>

<mosaic_0001>
module attributes {stable_mosaic.version = 11 : i64} {
  func.func @proj_rotary_kernel(%arg0: i32, %arg1: i32, %arg2: memref<1x8x32xf32, #tpu.memory_space<vmem>>, %arg3: memref<1x32xf32, #tpu.memory_space<vmem>>, %arg4: memref<32x96xbf16, #tpu.memory_space<vmem>>, %arg5: memref<16x16xf32, #tpu.memory_space<vmem>>, %arg6: memref<8x16xf32, #tpu.memory_space<vmem>>, %arg7: memref<8x16xf32, #tpu.memory_space<vmem>>, %arg8: memref<1x2x8x16xbf16, #tpu.memory_space<vmem>>, %arg9: memref<1x2x8x16xbf16, #tpu.memory_space<vmem>>, %arg10: memref<1x2x8x16xbf16, #tpu.memory_space<vmem>>, %arg11: memref<1x2x8x16xf32, #tpu.memory_space<vmem>>, %arg12: memref<1x2x8x16xf32, #tpu.memory_space<vmem>>) attributes {dimension_semantics = [#tpu.dimension_semantics<parallel>, #tpu.dimension_semantics<parallel>], iteration_bounds = array<i64: 2, 1>, scalar_prefetch = 0 : i64, scratch_operands = 0 : i64, tpu.core_type = #tpu.core_type<tc>, window_params = [{transform_indices = @transform_0, window_bounds = array<i64: 1, 8, 32>}, {pipeline_mode = #tpu.pipeline_mode<synchronous>, transform_indices = @transform_1, window_bounds = array<i64: 1, 32>}, {pipeline_mode = #tpu.pipeline_mode<synchronous>, transform_indices = @transform_2, window_bounds = array<i64: 32, 96>}, {pipeline_mode = #tpu.pipeline_mode<synchronous>, transform_indices = @transform_3, window_bounds = array<i64: 16, 16>}, {transform_indices = @transform_4, window_bounds = array<i64: 8, 16>}, {transform_indices = @transform_5, window_bounds = array<i64: 8, 16>}, {transform_indices = @transform_6, window_bounds = array<i64: 1, 2, 8, 16>}, {transform_indices = @transform_7, window_bounds = array<i64: 1, 2, 8, 16>}, {transform_indices = @transform_8, window_bounds = array<i64: 1, 2, 8, 16>}, {transform_indices = @transform_9, window_bounds = array<i64: 1, 2, 8, 16>}, {transform_indices = @transform_10, window_bounds = array<i64: 1, 2, 8, 16>}]} {
    %c0 = arith.constant 0 : index
    %c0_0 = arith.constant 0 : index
    %c0_1 = arith.constant 0 : index
    %0 = vector.load %arg2[%c0, %c0_0, %c0_1] : memref<1x8x32xf32, #tpu.memory_space<vmem>>, vector<1x8x32xf32>
    %1 = vector.shape_cast %0 : vector<1x8x32xf32> to vector<8x32xf32>
    %c0_2 = arith.constant 0 : index
    %c0_3 = arith.constant 0 : index
    %2 = vector.load %arg3[%c0_2, %c0_3] : memref<1x32xf32, #tpu.memory_space<vmem>>, vector<1x32xf32>
    %3 = arith.mulf %1, %1 : vector<8x32xf32>
    %cst = arith.constant dense<0.000000e+00> : vector<8xf32>
    %4 = vector.multi_reduction <add>, %3, %cst [1] : vector<8x32xf32> to vector<8xf32>
    %5 = vector.shape_cast %4 : vector<8xf32> to vector<8x1xf32>
    %cst_4 = arith.constant 1.000000e-24 : f32
    %6 = vector.broadcast %cst_4 : f32 to vector<8x1xf32>
    %7 = arith.maximumf %5, %6 : vector<8x1xf32>
    %8 = math.rsqrt %7 : vector<8x1xf32>
    %9 = vector.broadcast %8 : vector<8x1xf32> to vector<8x32xf32>
    %10 = arith.mulf %1, %9 : vector<8x32xf32>
    %cst_5 = arith.constant 5.65685415 : f32
    %11 = vector.broadcast %cst_5 : f32 to vector<8x32xf32>
    %12 = arith.mulf %10, %11 : vector<8x32xf32>
    %13 = vector.broadcast %2 : vector<1x32xf32> to vector<8x32xf32>
    %14 = arith.mulf %12, %13 : vector<8x32xf32>
    %15 = arith.truncf %14 : vector<8x32xf32> to vector<8x32xbf16>
    %c0_6 = arith.constant 0 : index
    %c0_7 = arith.constant 0 : index
    %16 = vector.load %arg4[%c0_6, %c0_7] : memref<32x96xbf16, #tpu.memory_space<vmem>>, vector<32x96xbf16>
    %cst_8 = arith.constant dense<0.000000e+00> : vector<8x96xf32>
    %17 = tpu.matmul %15, %16, %cst_8 {dimension_numbers = #tpu.dot_dimension_numbers<[1], [0], [0], [1], [0, 0, 1, 1], [], []>} : vector<8x32xbf16>, vector<32x96xbf16>, vector<8x96xf32> -> vector<8x96xf32>
    %18 = vector.extract_strided_slice %17 {offsets = [0, 0], sizes = [8, 32], strides = [1, 1]} : vector<8x96xf32> to vector<8x32xf32>
    %cst_9 = arith.constant 2.500000e-01 : f32
    %19 = vector.broadcast %cst_9 : f32 to vector<8x32xf32>
    %20 = arith.mulf %18, %19 : vector<8x32xf32>
    %21 = vector.extract_strided_slice %17 {offsets = [0, 32], sizes = [8, 32], strides = [1, 1]} : vector<8x96xf32> to vector<8x32xf32>
    %22 = vector.extract_strided_slice %17 {offsets = [0, 64], sizes = [8, 32], strides = [1, 1]} : vector<8x96xf32> to vector<8x32xf32>
    %c0_10 = arith.constant 0 : index
    %c0_11 = arith.constant 0 : index
    %23 = vector.load %arg6[%c0_10, %c0_11] : memref<8x16xf32, #tpu.memory_space<vmem>>, vector<8x16xf32>
    %c0_12 = arith.constant 0 : index
    %c0_13 = arith.constant 0 : index
    %24 = vector.load %arg7[%c0_12, %c0_13] : memref<8x16xf32, #tpu.memory_space<vmem>>, vector<8x16xf32>
    %c0_14 = arith.constant 0 : index
    %c0_15 = arith.constant 0 : index
    %25 = vector.load %arg5[%c0_14, %c0_15] : memref<16x16xf32, #tpu.memory_space<vmem>>, vector<16x16xf32>
    %26 = vector.extract_strided_slice %20 {offsets = [0, 0], sizes = [8, 16], strides = [1, 1]} : vector<8x32xf32> to vector<8x16xf32>
    %27 = vector.extract_strided_slice %21 {offsets = [0, 0], sizes = [8, 16], strides = [1, 1]} : vector<8x32xf32> to vector<8x16xf32>
    %28 = vector.extract_strided_slice %22 {offsets = [0, 0], sizes = [8, 16], strides = [1, 1]} : vector<8x32xf32> to vector<8x16xf32>
    %29 = arith.mulf %26, %23 : vector<8x16xf32>
    %cst_16 = arith.constant dense<0.000000e+00> : vector<8x16xf32>
    %30 = tpu.matmul %26, %25, %cst_16 {dimension_numbers = #tpu.dot_dimension_numbers<[1], [0], [0], [1], [0, 0, 1, 1], [], []>} : vector<8x16xf32>, vector<16x16xf32>, vector<8x16xf32> -> vector<8x16xf32>
    %31 = arith.mulf %30, %24 : vector<8x16xf32>
    %32 = arith.addf %29, %31 : vector<8x16xf32>
    %33 = arith.mulf %27, %23 : vector<8x16xf32>
    %cst_17 = arith.constant dense<0.000000e+00> : vector<8x16xf32>
    %34 = tpu.matmul %27, %25, %cst_17 {dimension_numbers = #tpu.dot_dimension_numbers<[1], [0], [0], [1], [0, 0, 1, 1], [], []>} : vector<8x16xf32>, vector<16x16xf32>, vector<8x16xf32> -> vector<8x16xf32>
    %35 = arith.mulf %34, %24 : vector<8x16xf32>
    %36 = arith.addf %33, %35 : vector<8x16xf32>
    %37 = arith.truncf %32 : vector<8x16xf32> to vector<8x16xbf16>
    %c0_18 = arith.constant 0 : index
    %c0_19 = arith.constant 0 : index
    %c0_20 = arith.constant 0 : index
    %c0_21 = arith.constant 0 : index
    %38 = vector.load %arg8[%c0_18, %c0_19, %c0_20, %c0_21] : memref<1x2x8x16xbf16, #tpu.memory_space<vmem>>, vector<1x1x8x16xbf16>
    %39 = vector.shape_cast %38 : vector<1x1x8x16xbf16> to vector<8x16xbf16>
    %40 = vector.shape_cast %37 : vector<8x16xbf16> to vector<1x1x8x16xbf16>
    tpu.vector_store %arg8[%c0_18, %c0_19, %c0_20, %c0_21], %40 {strides = array<i32>} : memref<1x2x8x16xbf16, #tpu.memory_space<vmem>>, vector<1x1x8x16xbf16>,
    %41 = arith.truncf %36 : vector<8x16xf32> to vector<8x16xbf16>
    %c0_22 = arith.constant 0 : index
    %c0_23 = arith.constant 0 : index
    %c0_24 = arith.constant 0 : index
    %c0_25 = arith.constant 0 : index
    %42 = vector.load %arg9[%c0_22, %c0_23, %c0_24, %c0_25] : memref<1x2x8x16xbf16, #tpu.memory_space<vmem>>, vector<1x1x8x16xbf16>
    %43 = vector.shape_cast %42 : vector<1x1x8x16xbf16> to vector<8x16xbf16>
    %44 = vector.shape_cast %41 : vector<8x16xbf16> to vector<1x1x8x16xbf16>
    tpu.vector_store %arg9[%c0_22, %c0_23, %c0_24, %c0_25], %44 {strides = array<i32>} : memref<1x2x8x16xbf16, #tpu.memory_space<vmem>>, vector<1x1x8x16xbf16>,
    %45 = arith.truncf %28 : vector<8x16xf32> to vector<8x16xbf16>
    %c0_26 = arith.constant 0 : index
    %c0_27 = arith.constant 0 : index
    %c0_28 = arith.constant 0 : index
    %c0_29 = arith.constant 0 : index
    %46 = vector.load %arg10[%c0_26, %c0_27, %c0_28, %c0_29] : memref<1x2x8x16xbf16, #tpu.memory_space<vmem>>, vector<1x1x8x16xbf16>
    %47 = vector.shape_cast %46 : vector<1x1x8x16xbf16> to vector<8x16xbf16>
    %48 = vector.shape_cast %45 : vector<8x16xbf16> to vector<1x1x8x16xbf16>
    tpu.vector_store %arg10[%c0_26, %c0_27, %c0_28, %c0_29], %48 {strides = array<i32>} : memref<1x2x8x16xbf16, #tpu.memory_space<vmem>>, vector<1x1x8x16xbf16>,
    %c0_30 = arith.constant 0 : index
    %c0_31 = arith.constant 0 : index
    %c0_32 = arith.constant 0 : index
    %c0_33 = arith.constant 0 : index
    %49 = vector.load %arg11[%c0_30, %c0_31, %c0_32, %c0_33] : memref<1x2x8x16xf32, #tpu.memory_space<vmem>>, vector<1x1x8x16xf32>
    %50 = vector.shape_cast %49 : vector<1x1x8x16xf32> to vector<8x16xf32>
    %51 = vector.shape_cast %27 : vector<8x16xf32> to vector<1x1x8x16xf32>
    tpu.vector_store %arg11[%c0_30, %c0_31, %c0_32, %c0_33], %51 {strides = array<i32>} : memref<1x2x8x16xf32, #tpu.memory_space<vmem>>, vector<1x1x8x16xf32>,
    %c0_34 = arith.constant 0 : index
    %c0_35 = arith.constant 0 : index
    %c0_36 = arith.constant 0 : index
    %c0_37 = arith.constant 0 : index
    %52 = vector.load %arg12[%c0_34, %c0_35, %c0_36, %c0_37] : memref<1x2x8x16xf32, #tpu.memory_space<vmem>>, vector<1x1x8x16xf32>
    %53 = vector.shape_cast %52 : vector<1x1x8x16xf32> to vector<8x16xf32>
    %54 = vector.shape_cast %28 : vector<8x16xf32> to vector<1x1x8x16xf32>
    tpu.vector_store %arg12[%c0_34, %c0_35, %c0_36, %c0_37], %54 {strides = array<i32>} : memref<1x2x8x16xf32, #tpu.memory_space<vmem>>, vector<1x1x8x16xf32>,
    %55 = vector.extract_strided_slice %20 {offsets = [0, 16], sizes = [8, 16], strides = [1, 1]} : vector<8x32xf32> to vector<8x16xf32>
    %56 = vector.extract_strided_slice %21 {offsets = [0, 16], sizes = [8, 16], strides = [1, 1]} : vector<8x32xf32> to vector<8x16xf32>
    %57 = vector.extract_strided_slice %22 {offsets = [0, 16], sizes = [8, 16], strides = [1, 1]} : vector<8x32xf32> to vector<8x16xf32>
    %58 = arith.mulf %55, %23 : vector<8x16xf32>
    %cst_38 = arith.constant dense<0.000000e+00> : vector<8x16xf32>
    %59 = tpu.matmul %55, %25, %cst_38 {dimension_numbers = #tpu.dot_dimension_numbers<[1], [0], [0], [1], [0, 0, 1, 1], [], []>} : vector<8x16xf32>, vector<16x16xf32>, vector<8x16xf32> -> vector<8x16xf32>
    %60 = arith.mulf %59, %24 : vector<8x16xf32>
    %61 = arith.addf %58, %60 : vector<8x16xf32>
    %62 = arith.mulf %56, %23 : vector<8x16xf32>
    %cst_39 = arith.constant dense<0.000000e+00> : vector<8x16xf32>
    %63 = tpu.matmul %56, %25, %cst_39 {dimension_numbers = #tpu.dot_dimension_numbers<[1], [0], [0], [1], [0, 0, 1, 1], [], []>} : vector<8x16xf32>, vector<16x16xf32>, vector<8x16xf32> -> vector<8x16xf32>
    %64 = arith.mulf %63, %24 : vector<8x16xf32>
    %65 = arith.addf %62, %64 : vector<8x16xf32>
    %66 = arith.truncf %61 : vector<8x16xf32> to vector<8x16xbf16>
    %c0_40 = arith.constant 0 : index
    %c1 = arith.constant 1 : index
    %c0_41 = arith.constant 0 : index
    %c0_42 = arith.constant 0 : index
    %67 = vector.load %arg8[%c0_40, %c1, %c0_41, %c0_42] : memref<1x2x8x16xbf16, #tpu.memory_space<vmem>>, vector<1x1x8x16xbf16>
    %68 = vector.shape_cast %67 : vector<1x1x8x16xbf16> to vector<8x16xbf16>
    %69 = vector.shape_cast %66 : vector<8x16xbf16> to vector<1x1x8x16xbf16>
    tpu.vector_store %arg8[%c0_40, %c1, %c0_41, %c0_42], %69 {strides = array<i32>} : memref<1x2x8x16xbf16, #tpu.memory_space<vmem>>, vector<1x1x8x16xbf16>,
    %70 = arith.truncf %65 : vector<8x16xf32> to vector<8x16xbf16>
    %c0_43 = arith.constant 0 : index
    %c1_44 = arith.constant 1 : index
    %c0_45 = arith.constant 0 : index
    %c0_46 = arith.constant 0 : index
    %71 = vector.load %arg9[%c0_43, %c1_44, %c0_45, %c0_46] : memref<1x2x8x16xbf16, #tpu.memory_space<vmem>>, vector<1x1x8x16xbf16>
    %72 = vector.shape_cast %71 : vector<1x1x8x16xbf16> to vector<8x16xbf16>
    %73 = vector.shape_cast %70 : vector<8x16xbf16> to vector<1x1x8x16xbf16>
    tpu.vector_store %arg9[%c0_43, %c1_44, %c0_45, %c0_46], %73 {strides = array<i32>} : memref<1x2x8x16xbf16, #tpu.memory_space<vmem>>, vector<1x1x8x16xbf16>,
    %74 = arith.truncf %57 : vector<8x16xf32> to vector<8x16xbf16>
    %c0_47 = arith.constant 0 : index
    %c1_48 = arith.constant 1 : index
    %c0_49 = arith.constant 0 : index
    %c0_50 = arith.constant 0 : index
    %75 = vector.load %arg10[%c0_47, %c1_48, %c0_49, %c0_50] : memref<1x2x8x16xbf16, #tpu.memory_space<vmem>>, vector<1x1x8x16xbf16>
    %76 = vector.shape_cast %75 : vector<1x1x8x16xbf16> to vector<8x16xbf16>
    %77 = vector.shape_cast %74 : vector<8x16xbf16> to vector<1x1x8x16xbf16>
    tpu.vector_store %arg10[%c0_47, %c1_48, %c0_49, %c0_50], %77 {strides = array<i32>} : memref<1x2x8x16xbf16, #tpu.memory_space<vmem>>, vector<1x1x8x16xbf16>,
    %c0_51 = arith.constant 0 : index
    %c1_52 = arith.constant 1 : index
    %c0_53 = arith.constant 0 : index
    %c0_54 = arith.constant 0 : index
    %78 = vector.load %arg11[%c0_51, %c1_52, %c0_53, %c0_54] : memref<1x2x8x16xf32, #tpu.memory_space<vmem>>, vector<1x1x8x16xf32>
    %79 = vector.shape_cast %78 : vector<1x1x8x16xf32> to vector<8x16xf32>
    %80 = vector.shape_cast %56 : vector<8x16xf32> to vector<1x1x8x16xf32>
    tpu.vector_store %arg11[%c0_51, %c1_52, %c0_53, %c0_54], %80 {strides = array<i32>} : memref<1x2x8x16xf32, #tpu.memory_space<vmem>>, vector<1x1x8x16xf32>,
    %c0_55 = arith.constant 0 : index
    %c1_56 = arith.constant 1 : index
    %c0_57 = arith.constant 0 : index
    %c0_58 = arith.constant 0 : index
    %81 = vector.load %arg12[%c0_55, %c1_56, %c0_57, %c0_58] : memref<1x2x8x16xf32, #tpu.memory_space<vmem>>, vector<1x1x8x16xf32>
    %82 = vector.shape_cast %81 : vector<1x1x8x16xf32> to vector<8x16xf32>
    %83 = vector.shape_cast %57 : vector<8x16xf32> to vector<1x1x8x16xf32>
    tpu.vector_store %arg12[%c0_55, %c1_56, %c0_57, %c0_58], %83 {strides = array<i32>} : memref<1x2x8x16xf32, #tpu.memory_space<vmem>>, vector<1x1x8x16xf32>,
    return
  }
  func.func @transform_0(%arg0: i32, %arg1: i32) -> (i32, i32, i32) {
    %c0_i32 = arith.constant 0 : i32
    %c0_i32_0 = arith.constant 0 : i32
    return %arg0, %arg1, %c0_i32 : i32, i32, i32
  }
  func.func @transform_1(%arg0: i32, %arg1: i32) -> (i32, i32) {
    %c0_i32 = arith.constant 0 : i32
    %c0_i32_0 = arith.constant 0 : i32
    %c0_i32_1 = arith.constant 0 : i32
    return %c0_i32, %c0_i32_0 : i32, i32
  }
  func.func @transform_2(%arg0: i32, %arg1: i32) -> (i32, i32) {
    %c0_i32 = arith.constant 0 : i32
    %c0_i32_0 = arith.constant 0 : i32
    %c0_i32_1 = arith.constant 0 : i32
    return %c0_i32, %c0_i32_0 : i32, i32
  }
  func.func @transform_3(%arg0: i32, %arg1: i32) -> (i32, i32) {
    %c0_i32 = arith.constant 0 : i32
    %c0_i32_0 = arith.constant 0 : i32
    %c0_i32_1 = arith.constant 0 : i32
    return %c0_i32, %c0_i32_0 : i32, i32
  }
  func.func @transform_4(%arg0: i32, %arg1: i32) -> (i32, i32) {
    %c0_i32 = arith.constant 0 : i32
    %c0_i32_0 = arith.constant 0 : i32
    return %arg1, %c0_i32 : i32, i32
  }
  func.func @transform_5(%arg0: i32, %arg1: i32) -> (i32, i32) {
    %c0_i32 = arith.constant 0 : i32
    %c0_i32_0 = arith.constant 0 : i32
    return %arg1, %c0_i32 : i32, i32
  }
  func.func @transform_6(%arg0: i32, %arg1: i32) -> (i32, i32, i32, i32) {
    %c0_i32 = arith.constant 0 : i32
    %c0_i32_0 = arith.constant 0 : i32
    %c0_i32_1 = arith.constant 0 : i32
    return %arg0, %c0_i32, %arg1, %c0_i32_0 : i32, i32, i32, i32
  }
  func.func @transform_7(%arg0: i32, %arg1: i32) -> (i32, i32, i32, i32) {
    %c0_i32 = arith.constant 0 : i32
    %c0_i32_0 = arith.constant 0 : i32
    %c0_i32_1 = arith.constant 0 : i32
    return %arg0, %c0_i32, %arg1, %c0_i32_0 : i32, i32, i32, i32
  }
  func.func @transform_8(%arg0: i32, %arg1: i32) -> (i32, i32, i32, i32) {
    %c0_i32 = arith.constant 0 : i32
    %c0_i32_0 = arith.constant 0 : i32
    %c0_i32_1 = arith.constant 0 : i32
    return %arg0, %c0_i32, %arg1, %c0_i32_0 : i32, i32, i32, i32
  }
  func.func @transform_9(%arg0: i32, %arg1: i32) -> (i32, i32, i32, i32) {
    %c0_i32 = arith.constant 0 : i32
    %c0_i32_0 = arith.constant 0 : i32
    %c0_i32_1 = arith.constant 0 : i32
    return %arg0, %c0_i32, %arg1, %c0_i32_0 : i32, i32, i32, i32
  }
  func.func @transform_10(%arg0: i32, %arg1: i32) -> (i32, i32, i32, i32) {
    %c0_i32 = arith.constant 0 : i32
    %c0_i32_0 = arith.constant 0 : i32
    %c0_i32_1 = arith.constant 0 : i32
    return %arg0, %c0_i32, %arg1, %c0_i32_0 : i32, i32, i32, i32
  }
}

</mosaic_0001>

<llo_original>
// kernel: tpu_custom_call.1
$region0: #{tpu_custom_call.1}
  #allocation0 [shape = 'u32[]', space=smem, size = 0x4, offset = 0x4, fixed_abs, tag = 'smem constant byte address 0x4 - core index']
  #allocation1 [shape = 'u32[144,128]{1,0:T(1,128)}', space=vmem, size = 0x12000, scoped, tag = 'internal scratch']
  %s0 = inlined_call_operand.hbm [shape: f32[2,8,32], index: 0, kind: input, shape index: {}]
  %s1 = inlined_call_operand.vmem [shape: f32[1,32], index: 1, kind: input, shape index: {}]
  %s2 = inlined_call_operand.hbm [shape: bf16[32,96], index: 2, kind: input, shape index: {}]
  %s3 = inlined_call_operand.hbm [shape: f32[16,16], index: 3, kind: input, shape index: {}]
  %s4 = inlined_call_operand.hbm [shape: f32[8,16], index: 4, kind: input, shape index: {}]
  %s5 = inlined_call_operand.vmem [shape: f32[8,16], index: 5, kind: input, shape index: {}]
  %s6 = inlined_call_operand.hbm [shape: bf16[2,2,8,16], index: 6, kind: output, shape index: {0}]
  %s7 = inlined_call_operand.hbm [shape: bf16[2,2,8,16], index: 7, kind: output, shape index: {1}]
  %s8 = inlined_call_operand.hbm [shape: bf16[2,2,8,16], index: 8, kind: output, shape index: {2}]
  %s9 = inlined_call_operand.hbm [shape: f32[2,2,8,16], index: 9, kind: output, shape index: {3}]
  %s10 = inlined_call_operand.hbm [shape: f32[2,2,8,16], index: 10, kind: output, shape index: {4}]
  %11 = xla_tuple %s6, %s7, %s8, %s9, %s10
  %s12 = sld [smem:[#allocation0]]
  $region105: #{tpu_custom_call.1} parent=0
    _
  %s14 = ssub.s32 1, %s12
  %s15 = scalar_select 0, %s14, %s12
  $region1: #{tpu_custom_call.1} parent=0
    #allocation2 [shape = 'u8[8192]{0}', space=vmem, size = 0x2000, scoped, tag = 'input window, operand 0']
    #allocation3 [shape = 's32[2]{0}', space=sflag, size = 0x8, scoped, tag = 'scoped memory for tpu_custom_call.1']
    #allocation4 [shape = 's32[2]{0}', space=sflag, size = 0x8, scoped, tag = 'scoped memory for tpu_custom_call.1']
    #allocation5 [shape = 'u8[8192]{0}', space=vmem, size = 0x2000, scoped, tag = 'input window, operand 2, single buffered']
    #allocation6 [shape = 's32[1]{0}', space=sflag, size = 0x4, scoped, tag = 'scoped memory for tpu_custom_call.1']
    #allocation7 [shape = 'u8[8192]{0}', space=vmem, size = 0x2000, scoped, tag = 'input window, operand 3, single buffered']
    #allocation8 [shape = 'u8[4096]{0}', space=vmem, size = 0x1000, scoped, tag = 'input window, operand 4, single buffered']
    #allocation9 [shape = 's32[1]{0}', space=sflag, size = 0x4, scoped, tag = 'scoped memory for tpu_custom_call.1']
    #allocation10 [shape = 'u8[8192]{0}', space=vmem, size = 0x2000, scoped, tag = 'output window, operand 0']
    #allocation11 [shape = 'u8[8192]{0}', space=vmem, size = 0x2000, scoped, tag = 'output window, operand 1']
    #allocation12 [shape = 's32[2]{0}', space=sflag, size = 0x8, scoped, tag = 'scoped memory for tpu_custom_call.1']
    #allocation13 [shape = 'u8[8192]{0}', space=vmem, size = 0x2000, scoped, tag = 'output window, operand 2']
    #allocation14 [shape = 'u8[16384]{0}', space=vmem, size = 0x4000, scoped, tag = 'output window, operand 3']
    #allocation15 [shape = 's32[2]{0}', space=sflag, size = 0x8, scoped, tag = 'scoped memory for tpu_custom_call.1']
    #allocation16 [shape = 'u8[16384]{0}', space=vmem, size = 0x4000, scoped, tag = 'output window, operand 4']
    %16 = vsyncpa [#allocation3], 0
    %s17 = scalar_lea.sflag [#allocation3], 1
    %18 = vsyncpa %s17, 0
    %19 = vsyncpa [#allocation6], 0
    %20 = vsyncpa [#allocation9], 0
    %21 = vsyncpa [#allocation4], 0
    %s22 = scalar_lea.sflag [#allocation4], 1
    %23 = vsyncpa %s22, 0
    %24 = vsyncpa [#allocation12], 0
    %s25 = scalar_lea.sflag [#allocation12], 1
    %26 = vsyncpa %s25, 0
    %27 = vsyncpa [#allocation15], 0
    %s28 = scalar_lea.sflag [#allocation15], 1
    %29 = vsyncpa %s28, 0
    loop: start=0, step=1, limit=4
    $region2: #{tpu_custom_call.1} parent=1 // loop_pre_header
      _
    $region3: #{tpu_custom_call.1} parent=1 // loop_header
      %s31 = sphi 0, %s35
      %p32 = scmp.ge.s32.totalorder %s31, 4
      %s38 = sphi 0, %s50
      %s39 = sphi 0, %s46
      %s40 = sphi 0, %s38
      %s41 = sphi 0, %s39
      %s42 = sphi 0, %s40
      %s43 = sphi 0, %s41
      %s55 = sphi 0, %s57
      %s58 = sphi 0, %s55
      %s59 = sphi 0, %s58
      %s75 = sphi 0, %s59
      %s79 = sphi 0, %s79
      %s81 = sphi 0, %s79
      %s82 = sphi 0, %s81
      %s96 = sphi 0, %s82
      %s100 = sphi 0, %s100
      %s102 = sphi 0, %s100
      %s103 = sphi 0, %s102
      %s117 = sphi 0, %s103
      %s121 = sphi 0, %s121
      %s123 = sphi 0, %s121
      %s124 = sphi 0, %s123
      %s138 = sphi 0, %s124
      %s144 = sphi 0, %s146
      %s147 = sphi 0, %s144
      %s148 = sphi 0, %s147
      %s164 = sphi 0, %s148
      %s170 = sphi 0, %s172
      %s173 = sphi 0, %s170
      %s174 = sphi 0, %s173
      %s190 = sphi 0, %s174
      %s198 = sphi 0, %s200
      %s201 = sphi 0, %s198
      %s202 = sphi 0, %s201
      %s218 = sphi 0, %s202
      %s226 = sphi 0, %s228
      %s229 = sphi 0, %s226
      %s230 = sphi 0, %s229
      %s246 = sphi 0, %s230
      %s254 = sphi 0, %s256
      %s257 = sphi 0, %s254
      %s258 = sphi 0, %s257
      %s274 = sphi 0, %s258
      %s282 = sphi 0, %s284
      %s285 = sphi 0, %s282
      %s286 = sphi 0, %s285
      %s302 = sphi 0, %s286
      %s310 = sphi 0, %s312
      %s313 = sphi 0, %s310
      %s314 = sphi 0, %s313
      %s330 = sphi 0, %s314
    $region4: #{tpu_custom_call.1} parent=1 // loop_header_branch
      %34 = sbr.rel (%p32) target = $region8
    $region5: #{tpu_custom_call.1} parent=1 // loop_body
      %s36 = ssub.s32 %s31, 1
      %s37 = ssub.s32 %s31, 2
      %s44 = sadd.s32 1, %s39
      %p45 = scmp.ge.s32.totalorder %s44, 1
      %s46 = scalar_select %p45, 0, %s44
      %s47 = sadd.s32 1, %s38
      %s48 = scalar_select %p45, %s47, %s38
      %p49 = scmp.ge.s32.totalorder %s48, 2
      %s50 = scalar_select %p49, 0, %s48
      %s51 = ssub.s32 %s38, %s50
      %s52 = ssub.s32 %s39, %s46
      %s53 = sor.u32 %s51, %s52
      %p54 = scmp.eq.s32.totalorder %s53, 0
      %s56 = sadd.s32 %s55, 1
      %s57 = scalar_select %p54, %s55, %s56
      %p60 = pneg %p54
      %p61 = scmp.eq.s32.totalorder %s31, 1
      %p62 = por %p60, %p61
      %p63 = scmp.ne.s32.totalorder %s55, %s58
      %p64 = scmp.eq.s32.totalorder %s31, 0
      %p65 = por %p63, %p64
      %p66 = scmp.ne.s32.totalorder %s55, %s58
      %p67 = scmp.eq.s32.totalorder %s36, 1
      %p68 = por %p66, %p67
      %p69 = scmp.ne.s32.totalorder %s58, %s59
      %p70 = scmp.eq.s32.totalorder %s36, 0
      %p71 = por %p69, %p70
      %p72 = scmp.ne.s32.totalorder %s58, %s59
      %p73 = scmp.eq.s32.totalorder %s37, 1
      %p74 = por %p72, %p73
      %p76 = scmp.ne.s32.totalorder %s59, %s75
      %p77 = scmp.eq.s32.totalorder %s37, 0
      %p78 = por %p76, %p77
      %s80 = sadd.s32 %s79, 1
      %p83 = scmp.eq.s32.totalorder %s31, 1
      %p84 = scmp.ne.s32.totalorder %s79, %s81
      %p85 = scmp.eq.s32.totalorder %s31, 0
      %p86 = por %p84, %p85
      %p87 = scmp.ne.s32.totalorder %s79, %s81
      %p88 = scmp.eq.s32.totalorder %s36, 1
      %p89 = por %p87, %p88
      %p90 = scmp.ne.s32.totalorder %s81, %s82
      %p91 = scmp.eq.s32.totalorder %s36, 0
      %p92 = por %p90, %p91
      %p93 = scmp.ne.s32.totalorder %s81, %s82
      %p94 = scmp.eq.s32.totalorder %s37, 1
      %p95 = por %p93, %p94
      %p97 = scmp.ne.s32.totalorder %s82, %s96
      %p98 = scmp.eq.s32.totalorder %s37, 0
      %p99 = por %p97, %p98
      %s101 = sadd.s32 %s100, 1
      %p104 = scmp.eq.s32.totalorder %s31, 1
      %p105 = scmp.ne.s32.totalorder %s100, %s102
      %p106 = scmp.eq.s32.totalorder %s31, 0
      %p107 = por %p105, %p106
      %p108 = scmp.ne.s32.totalorder %s100, %s102
      %p109 = scmp.eq.s32.totalorder %s36, 1
      %p110 = por %p108, %p109
      %p111 = scmp.ne.s32.totalorder %s102, %s103
      %p112 = scmp.eq.s32.totalorder %s36, 0
      %p113 = por %p111, %p112
      %p114 = scmp.ne.s32.totalorder %s102, %s103
      %p115 = scmp.eq.s32.totalorder %s37, 1
      %p116 = por %p114, %p115
      %p118 = scmp.ne.s32.totalorder %s103, %s117
      %p119 = scmp.eq.s32.totalorder %s37, 0
      %p120 = por %p118, %p119
      %s122 = sadd.s32 %s121, 1
      %p125 = scmp.eq.s32.totalorder %s31, 1
      %p126 = scmp.ne.s32.totalorder %s121, %s123
      %p127 = scmp.eq.s32.totalorder %s31, 0
      %p128 = por %p126, %p127
      %p129 = scmp.ne.s32.totalorder %s121, %s123
      %p130 = scmp.eq.s32.totalorder %s36, 1
      %p131 = por %p129, %p130
      %p132 = scmp.ne.s32.totalorder %s123, %s124
      %p133 = scmp.eq.s32.totalorder %s36, 0
      %p134 = por %p132, %p133
      %p135 = scmp.ne.s32.totalorder %s123, %s124
      %p136 = scmp.eq.s32.totalorder %s37, 1
      %p137 = por %p135, %p136
      %p139 = scmp.ne.s32.totalorder %s124, %s138
      %p140 = scmp.eq.s32.totalorder %s37, 0
      %p141 = por %p139, %p140
      %s142 = ssub.s32 %s39, %s46
      %p143 = scmp.eq.s32.totalorder %s142, 0
      %s145 = sadd.s32 %s144, 1
      %s146 = scalar_select %p143, %s144, %s145
      %p149 = pneg %p143
      %p150 = scmp.eq.s32.totalorder %s31, 1
      %p151 = por %p149, %p150
      %p152 = scmp.ne.s32.totalorder %s144, %s147
      %p153 = scmp.eq.s32.totalorder %s31, 0
      %p154 = por %p152, %p153
      %p155 = scmp.ne.s32.totalorder %s144, %s147
      %p156 = scmp.eq.s32.totalorder %s36, 1
      %p157 = por %p155, %p156
      %p158 = scmp.ne.s32.totalorder %s147, %s148
      %p159 = scmp.eq.s32.totalorder %s36, 0
      %p160 = por %p158, %p159
      %p161 = scmp.ne.s32.totalorder %s147, %s148
      %p162 = scmp.eq.s32.totalorder %s37, 1
      %p163 = por %p161, %p162
      %p165 = scmp.ne.s32.totalorder %s148, %s164
      %p166 = scmp.eq.s32.totalorder %s37, 0
      %p167 = por %p165, %p166
      %s168 = ssub.s32 %s39, %s46
      %p169 = scmp.eq.s32.totalorder %s168, 0
      %s171 = sadd.s32 %s170, 1
      %s172 = scalar_select %p169, %s170, %s171
      %p175 = pneg %p169
      %p176 = scmp.eq.s32.totalorder %s31, 1
      %p177 = por %p175, %p176
      %p178 = scmp.ne.s32.totalorder %s170, %s173
      %p179 = scmp.eq.s32.totalorder %s31, 0
      %p180 = por %p178, %p179
      %p181 = scmp.ne.s32.totalorder %s170, %s173
      %p182 = scmp.eq.s32.totalorder %s36, 1
      %p183 = por %p181, %p182
      %p184 = scmp.ne.s32.totalorder %s173, %s174
      %p185 = scmp.eq.s32.totalorder %s36, 0
      %p186 = por %p184, %p185
      %p187 = scmp.ne.s32.totalorder %s173, %s174
      %p188 = scmp.eq.s32.totalorder %s37, 1
      %p189 = por %p187, %p188
      %p191 = scmp.ne.s32.totalorder %s174, %s190
      %p192 = scmp.eq.s32.totalorder %s37, 0
      %p193 = por %p191, %p192
      %s194 = ssub.s32 %s38, %s50
      %s195 = ssub.s32 %s39, %s46
      %s196 = sor.u32 %s194, %s195
      %p197 = scmp.eq.s32.totalorder %s196, 0
      %s199 = sadd.s32 %s198, 1
      %s200 = scalar_select %p197, %s198, %s199
      %p203 = pneg %p197
      %p204 = scmp.eq.s32.totalorder %s31, 1
      %p205 = por %p203, %p204
      %p206 = scmp.ne.s32.totalorder %s198, %s201
      %p207 = scmp.eq.s32.totalorder %s31, 0
      %p208 = por %p206, %p207
      %p209 = scmp.ne.s32.totalorder %s198, %s201
      %p210 = scmp.eq.s32.totalorder %s36, 1
      %p211 = por %p209, %p210
      %p212 = scmp.ne.s32.totalorder %s201, %s202
      %p213 = scmp.eq.s32.totalorder %s36, 0
      %p214 = por %p212, %p213
      %p215 = scmp.ne.s32.totalorder %s201, %s202
      %p216 = scmp.eq.s32.totalorder %s37, 1
      %p217 = por %p215, %p216
      %p219 = scmp.ne.s32.totalorder %s202, %s218
      %p220 = scmp.eq.s32.totalorder %s37, 0
      %p221 = por %p219, %p220
      %s222 = ssub.s32 %s38, %s50
      %s223 = ssub.s32 %s39, %s46
      %s224 = sor.u32 %s222, %s223
      %p225 = scmp.eq.s32.totalorder %s224, 0
      %s227 = sadd.s32 %s226, 1
      %s228 = scalar_select %p225, %s226, %s227
      %p231 = pneg %p225
      %p232 = scmp.eq.s32.totalorder %s31, 1
      %p233 = por %p231, %p232
      %p234 = scmp.ne.s32.totalorder %s226, %s229
      %p235 = scmp.eq.s32.totalorder %s31, 0
      %p236 = por %p234, %p235
      %p237 = scmp.ne.s32.totalorder %s226, %s229
      %p238 = scmp.eq.s32.totalorder %s36, 1
      %p239 = por %p237, %p238
      %p240 = scmp.ne.s32.totalorder %s229, %s230
      %p241 = scmp.eq.s32.totalorder %s36, 0
      %p242 = por %p240, %p241
      %p243 = scmp.ne.s32.totalorder %s229, %s230
      %p244 = scmp.eq.s32.totalorder %s37, 1
      %p245 = por %p243, %p244
      %p247 = scmp.ne.s32.totalorder %s230, %s246
      %p248 = scmp.eq.s32.totalorder %s37, 0
      %p249 = por %p247, %p248
      %s250 = ssub.s32 %s38, %s50
      %s251 = ssub.s32 %s39, %s46
      %s252 = sor.u32 %s250, %s251
      %p253 = scmp.eq.s32.totalorder %s252, 0
      %s255 = sadd.s32 %s254, 1
      %s256 = scalar_select %p253, %s254, %s255
      %p259 = pneg %p253
      %p260 = scmp.eq.s32.totalorder %s31, 1
      %p261 = por %p259, %p260
      %p262 = scmp.ne.s32.totalorder %s254, %s257
      %p263 = scmp.eq.s32.totalorder %s31, 0
      %p264 = por %p262, %p263
      %p265 = scmp.ne.s32.totalorder %s254, %s257
      %p266 = scmp.eq.s32.totalorder %s36, 1
      %p267 = por %p265, %p266
      %p268 = scmp.ne.s32.totalorder %s257, %s258
      %p269 = scmp.eq.s32.totalorder %s36, 0
      %p270 = por %p268, %p269
      %p271 = scmp.ne.s32.totalorder %s257, %s258
      %p272 = scmp.eq.s32.totalorder %s37, 1
      %p273 = por %p271, %p272
      %p275 = scmp.ne.s32.totalorder %s258, %s274
      %p276 = scmp.eq.s32.totalorder %s37, 0
      %p277 = por %p275, %p276
      %s278 = ssub.s32 %s38, %s50
      %s279 = ssub.s32 %s39, %s46
      %s280 = sor.u32 %s278, %s279
      %p281 = scmp.eq.s32.totalorder %s280, 0
      %s283 = sadd.s32 %s282, 1
      %s284 = scalar_select %p281, %s282, %s283
      %p287 = pneg %p281
      %p288 = scmp.eq.s32.totalorder %s31, 1
      %p289 = por %p287, %p288
      %p290 = scmp.ne.s32.totalorder %s282, %s285
      %p291 = scmp.eq.s32.totalorder %s31, 0
      %p292 = por %p290, %p291
      %p293 = scmp.ne.s32.totalorder %s282, %s285
      %p294 = scmp.eq.s32.totalorder %s36, 1
      %p295 = por %p293, %p294
      %p296 = scmp.ne.s32.totalorder %s285, %s286
      %p297 = scmp.eq.s32.totalorder %s36, 0
      %p298 = por %p296, %p297
      %p299 = scmp.ne.s32.totalorder %s285, %s286
      %p300 = scmp.eq.s32.totalorder %s37, 1
      %p301 = por %p299, %p300
      %p303 = scmp.ne.s32.totalorder %s286, %s302
      %p304 = scmp.eq.s32.totalorder %s37, 0
      %p305 = por %p303, %p304
      %s306 = ssub.s32 %s38, %s50
      %s307 = ssub.s32 %s39, %s46
      %s308 = sor.u32 %s306, %s307
      %p309 = scmp.eq.s32.totalorder %s308, 0
      %s311 = sadd.s32 %s310, 1
      %s312 = scalar_select %p309, %s310, %s311
      %p315 = pneg %p309
      %p316 = scmp.eq.s32.totalorder %s31, 1
      %p317 = por %p315, %p316
      %p318 = scmp.ne.s32.totalorder %s310, %s313
      %p319 = scmp.eq.s32.totalorder %s31, 0
      %p320 = por %p318, %p319
      %p321 = scmp.ne.s32.totalorder %s310, %s313
      %p322 = scmp.eq.s32.totalorder %s36, 1
      %p323 = por %p321, %p322
      %p324 = scmp.ne.s32.totalorder %s313, %s314
      %p325 = scmp.eq.s32.totalorder %s36, 0
      %p326 = por %p324, %p325
      %p327 = scmp.ne.s32.totalorder %s313, %s314
      %p328 = scmp.eq.s32.totalorder %s37, 1
      %p329 = por %p327, %p328
      %p331 = scmp.ne.s32.totalorder %s314, %s330
      %p332 = scmp.eq.s32.totalorder %s37, 0
      %p333 = por %p331, %p332
      %p334 = scmp.le.s32.totalorder 1, %s31
      %p335 = scmp.lt.s32.totalorder %s31, 3
      %p336 = pnand %p334, %p335
      %p337 = pneg %p336
      // Predicated region
      $region9: #{tpu_custom_call.1} parent=5 // pred_check
        _
      $region10: #{tpu_custom_call.1} parent=5 // pred_check_branch
        %339 = sbr.rel (%p336) target = $region12
      $region11: #{tpu_custom_call.1} parent=5 // pred_region
        %s340 = ssub.s32 %s31, 1
        // Predicated region
        $region13: #{tpu_custom_call.1} parent=11 // pred_check
          %p341 = pneg %p92
        $region14: #{tpu_custom_call.1} parent=11 // pred_check_branch
          %343 = sbr.rel (%p341) target = $region16
        $region15: #{tpu_custom_call.1} parent=11 // pred_region
          _
        $region16: #{tpu_custom_call.1} parent=11 // pred_fallthru
          _
        // Predicated region
        $region17: #{tpu_custom_call.1} parent=11 // pred_check
          %p344 = pneg %p113
        $region18: #{tpu_custom_call.1} parent=11 // pred_check_branch
          %346 = sbr.rel (%p344) target = $region20
        $region19: #{tpu_custom_call.1} parent=11 // pred_region
          %s348 = ssub.s32 256, 256
          %349 = vsyncadd [#allocation6], %s348
          %s350 = sshll.u32 [#allocation5], 4
          %s351 = int_to_ptr.vmem [resolvable:$true] %s350
          %356 = dma.hbm_to_vmem [thread:$0]  %s2, 256, %s351, [#allocation6], 64, 64, 4
        $region20: #{tpu_custom_call.1} parent=11 // pred_fallthru
          _
        // Predicated region
        $region21: #{tpu_custom_call.1} parent=11 // pred_check
          %p357 = pneg %p134
        $region22: #{tpu_custom_call.1} parent=11 // pred_check_branch
          %359 = sbr.rel (%p357) target = $region24
        $region23: #{tpu_custom_call.1} parent=11 // pred_region
          %s361 = ssub.s32 256, 256
          %362 = vsyncadd [#allocation6], %s361
          %s363 = sshll.u32 [#allocation7], 4
          %s364 = int_to_ptr.vmem [resolvable:$true] %s363
          %369 = dma.hbm_to_vmem [thread:$0]  %s3, 256, %s364, [#allocation6], 128, 128, 8
        $region24: #{tpu_custom_call.1} parent=11 // pred_fallthru
          _
        // Predicated region
        $region25: #{tpu_custom_call.1} parent=11 // pred_check
          %p370 = pneg %p160
        $region26: #{tpu_custom_call.1} parent=11 // pred_check_branch
          %372 = sbr.rel (%p370) target = $region28
        $region27: #{tpu_custom_call.1} parent=11 // pred_region
          %s374 = ssub.s32 128, 128
          %375 = vsyncadd [#allocation9], %s374
          %s376 = smul.addr %s41, 128
          %s377 = scalar_lea.hbm %s4, %s376
          %s379 = sshll.u32 [#allocation8], 4
          %s380 = int_to_ptr.vmem [resolvable:$true] %s379
          %382 = dma.hbm_to_vmem [thread:$0]  %s377, 128, %s380, [#allocation9]
        $region28: #{tpu_custom_call.1} parent=11 // pred_fallthru
          _
        // Predicated region
        $region29: #{tpu_custom_call.1} parent=11 // pred_check
          %p383 = pneg %p186
        $region30: #{tpu_custom_call.1} parent=11 // pred_check_branch
          %385 = sbr.rel (%p383) target = $region32
        $region31: #{tpu_custom_call.1} parent=11 // pred_region
          %p386 = scmp.lt.s32.totalorder %s41, 0
          %s387 = scalar_select %p386, %s41, 0
          %s388 = smul.addr %s387, 8
          %s389 = scalar_lea.vmem %s5, %s388
        $region32: #{tpu_custom_call.1} parent=11 // pred_fallthru
          _
      $region12: #{tpu_custom_call.1} parent=5 // pred_fallthru
        _
      %p390 = scmp.lt.s32.totalorder %s31, 2
      // Predicated region
      $region33: #{tpu_custom_call.1} parent=5 // pred_check
        %p391 = pneg %p390
      $region34: #{tpu_custom_call.1} parent=5 // pred_check_branch
        %393 = sbr.rel (%p391) target = $region36
      $region35: #{tpu_custom_call.1} parent=5 // pred_region
        // Predicated region
        $region37: #{tpu_custom_call.1} parent=35 // pred_check
          %p394 = pneg %p65
        $region38: #{tpu_custom_call.1} parent=35 // pred_check_branch
          %396 = sbr.rel (%p394) target = $region40
        $region39: #{tpu_custom_call.1} parent=35 // pred_region
          %s397 = sand.u32 %s55, 1
          %s398 = scalar_lea.sflag [#allocation3], %s397
          %s399 = sand.u32 %s55, 1
          %s400 = smul.addr %s399, 8
          %s401 = scalar_lea.vmem [#allocation2], %s400
          %s403 = ssub.s32 128, 128
          %404 = vsyncadd %s398, %s403
          %s405 = sadd.s32 %s39, %s38
          %s406 = smul.addr %s405, 128
          %s407 = scalar_lea.hbm %s0, %s406
          %s409 = sshll.u32 %s401, 4
          %s410 = int_to_ptr.vmem [resolvable:$true] %s409
          %412 = dma.hbm_to_vmem [thread:$0]  %s407, 128, %s410, %s398
        $region40: #{tpu_custom_call.1} parent=35 // pred_fallthru
          _
      $region36: #{tpu_custom_call.1} parent=5 // pred_fallthru
        _
      %p413 = scmp.le.s32.totalorder 1, %s31
      %p414 = scmp.lt.s32.totalorder %s31, 3
      %p415 = pnand %p413, %p414
      %p416 = pneg %p415
      // Predicated region
      $region41: #{tpu_custom_call.1} parent=5 // pred_check
        _
      $region42: #{tpu_custom_call.1} parent=5 // pred_check_branch
        %418 = sbr.rel (%p415) target = $region44
      $region43: #{tpu_custom_call.1} parent=5 // pred_region
        %s419 = ssub.s32 %s31, 1
        %s420 = sand.u32 %s58, 1
        %s421 = scalar_lea.sflag [#allocation3], %s420
        %s422 = sand.u32 %s58, 1
        %s423 = smul.addr %s422, 8
        %s424 = scalar_lea.vmem [#allocation2], %s423
        // Predicated region
        $region45: #{tpu_custom_call.1} parent=43 // pred_check
          %p425 = pneg %p71
        $region46: #{tpu_custom_call.1} parent=43 // pred_check_branch
          %427 = sbr.rel (%p425) target = $region48
        $region47: #{tpu_custom_call.1} parent=43 // pred_region
          %428 = dma.done %s421, 128
        $region48: #{tpu_custom_call.1} parent=43 // pred_fallthru
          _
        // Predicated region
        $region49: #{tpu_custom_call.1} parent=43 // pred_check
          %p429 = pneg %p113
        $region50: #{tpu_custom_call.1} parent=43 // pred_check_branch
          %431 = sbr.rel (%p429) target = $region52
        $region51: #{tpu_custom_call.1} parent=43 // pred_region
          %432 = dma.done [#allocation6], 256
        $region52: #{tpu_custom_call.1} parent=43 // pred_fallthru
          _
        // Predicated region
        $region53: #{tpu_custom_call.1} parent=43 // pred_check
          %p433 = pneg %p134
        $region54: #{tpu_custom_call.1} parent=43 // pred_check_branch
          %435 = sbr.rel (%p433) target = $region56
        $region55: #{tpu_custom_call.1} parent=43 // pred_region
          %436 = dma.done [#allocation6], 256
        $region56: #{tpu_custom_call.1} parent=43 // pred_fallthru
          _
        // Predicated region
        $region57: #{tpu_custom_call.1} parent=43 // pred_check
          %p437 = pneg %p160
        $region58: #{tpu_custom_call.1} parent=43 // pred_check_branch
          %439 = sbr.rel (%p437) target = $region60
        $region59: #{tpu_custom_call.1} parent=43 // pred_region
          %440 = dma.done [#allocation9], 128
        $region60: #{tpu_custom_call.1} parent=43 // pred_fallthru
          _
        %s441 = sand.u32 %s58, 1
        %s442 = scalar_lea.sflag [#allocation3], %s441
        %s443 = sand.u32 %s58, 1
        %s444 = smul.addr %s443, 8
        %s445 = scalar_lea.vmem [#allocation2], %s444
        %p446 = pneg %p71
        %p447 = pneg %p68
        %p448 = pneg %p92
        %p449 = pneg %p89
        %p450 = pneg %p113
        %p451 = pneg %p110
        %p452 = pneg %p134
        %p453 = pneg %p131
        %p454 = pneg %p160
        %p455 = pneg %p157
        %p456 = scmp.lt.s32.totalorder %s41, 0
        %s457 = scalar_select %p456, %s41, 0
        %s458 = smul.addr %s457, 8
        %s459 = scalar_lea.vmem %s5, %s458
        %p460 = pneg %p186
        %p461 = pneg %p183
        %p462 = pneg %p214
        %p463 = pneg %p211
        %s464 = sand.u32 %s201, 1
        %s465 = scalar_lea.sflag [#allocation4], %s464
        %s466 = sand.u32 %s201, 1
        %s467 = smul.addr %s466, 8
        %s468 = scalar_lea.vmem [#allocation10], %s467
        %p469 = pneg %p242
        %p470 = pneg %p239
        %s471 = sand.u32 %s36, 1
        %s472 = scalar_lea.sflag [#allocation12], %s471
        %s473 = sand.u32 %s229, 1
        %s474 = smul.addr %s473, 8
        %s475 = scalar_lea.vmem [#allocation11], %s474
        %p476 = pneg %p270
        %p477 = pneg %p267
        %s478 = sand.u32 %s36, 1
        %s479 = scalar_lea.sflag [#allocation12], %s478
        %s480 = sand.u32 %s257, 1
        %s481 = smul.addr %s480, 8
        %s482 = scalar_lea.vmem [#allocation13], %s481
        %p483 = pneg %p298
        %p484 = pneg %p295
        %s485 = sand.u32 %s36, 1
        %s486 = scalar_lea.sflag [#allocation15], %s485
        %s487 = sand.u32 %s285, 1
        %s488 = smul.addr %s487, 16
        %s489 = scalar_lea.vmem [#allocation14], %s488
        %p490 = pneg %p326
        %p491 = pneg %p323
        %s492 = sand.u32 %s36, 1
        %s493 = scalar_lea.sflag [#allocation15], %s492
        %s494 = sand.u32 %s313, 1
        %s495 = smul.addr %s494, 16
        %s496 = scalar_lea.vmem [#allocation16], %s495
        %p497 = scmp.lt.s32.totalorder %s41, 0
        %s498 = scalar_select %p497, %s41, 0
        %s499 = smul.addr %s498, 8
        %s500 = scalar_lea.vmem %s5, %s499
        %v502 = vld [vmem:[%s424] sm:$0xff]
        %v503 = vld [vmem:[%s1] sm:$0x1]
        %v504 = vmul.f32 %v502, %v502
        %vm505 = vcmask 261120
        %v506 = vsel %vm505, %v504, 0.0
        %507 = vadd.xlane.f32.xlu0 %v506
        %v508 = vpop.xlane.xlu0 %507
        %v509 = vmax.f32 %v508, 1e-24
        %v510 = vrsqrt.pop %v509
        %v511 = vmul.f32 %v502, %v510
        %v512 = vmul.f32 %v511, 5.656854
        %v514 = vlaneseq
        %v515 = vshrl.u32 %v514, 7
        %v516 = vsub.s32 0, %v515
        %v517 = vrot.slane %v503, %v516
        %v519 = vmul.f32 %v512, %v517
        %v520 = vpack.c.bf16 %v519, %v519
        %v521 = vld [vmem:[#allocation5] sm:$0xf]
        %v522 = vld [vmem:[#allocation5 + $0x4] sm:$0xf]
        %v523 = vld [vmem:[#allocation5 + $0x8] sm:$0xf]
        %v524 = vld [vmem:[#allocation5 + $0xc] sm:$0xf]
        %v529 = vunpack.c.l.b16 %v521
        %v530 = vunpack.c.l.b16 %v522
        %v531 = vunpack.c.l.b16 %v523
        %v532 = vunpack.c.l.b16 %v524
        %v533 = vpack.c.b16 %v530, %v529
        %v534 = vpack.c.b16 %v532, %v531
        %v538 = vsel %vm505, %v520, 0
        %540 = vmatprep.subr.bf16.mxu0 0
        %541 = vmatpush1.bf16.msra.mxu0 0
        %542 = vmatprep.subr.bf16.mxu0 0
        %543 = vmatpush1.bf16.msra.mxu0 0
        %544 = vmatprep.subr.bf16.mxu0 0
        %545 = vmatpush1.bf16.msra.mxu0 0
        %546 = vmatprep.subr.bf16.mxu0 0
        %547 = vmatpush1.bf16.msra.mxu0 0
        %548 = vmatprep.subr.bf16.mxu0 0
        %549 = vmatpush1.bf16.msra.mxu0 0
        %550 = vmatprep.subr.bf16.mxu0 0
        %551 = vmatpush1.bf16.msra.mxu0 0
        %552 = vmatprep.subr.bf16.mxu0 0
        %553 = vmatpush1.bf16.msra.mxu0 %v534
        %554 = vmatprep.subr.bf16.mxu0 0
        %555 = vmatpush1.bf16.msra.mxu0 %v533
        %556 = vmatprep.subr.bf16.mxu0 0
        %557 = vmatpush2.bf16.msra.mxu0 0
        %558 = vmatprep.subr.bf16.mxu0 0
        %559 = vmatpush2.bf16.msra.mxu0 0
        %560 = vmatprep.subr.bf16.mxu0 0
        %561 = vmatpush2.bf16.msra.mxu0 0
        %562 = vmatprep.subr.bf16.mxu0 0
        %563 = vmatpush2.bf16.msra.mxu0 0
        %564 = vmatprep.subr.bf16.mxu0 0
        %565 = vmatpush2.bf16.msra.mxu0 0
        %566 = vmatprep.subr.bf16.mxu0 0
        %567 = vmatpush2.bf16.msra.mxu0 0
        %568 = vmatprep.subr.bf16.mxu0 0
        %569 = vmatpush2.bf16.msra.mxu0 0
        %570 = vmatprep.subr.bf16.mxu0 0
        %571 = vmatpush2.bf16.msra.mxu0 0
        %572 = vmatprep.mubr.bf16.mxu0 0
        %573 = vmatmul.mubr.bf16.gmra.mxu0 %v538
        %v574 = vpop.f32.mrf.mxu0
        %v575 = vadd.f32 0.0, %v574
        %v576 = vpop.f32.mrf.mxu0
        %v577 = vpop.f32.mrf.mxu0
        %v578 = vpop.f32.mrf.mxu0
        %579 = vdwg.mxu0
        %v580 = vmul.f32 %v575, 0.25
        %v581 = vld [vmem:[#allocation8] sm:$0xff]
        %v582 = vld [vmem:[%s500] sm:$0xff]
        %v583 = vld [vmem:[#allocation7] sm:$0xff]
        %v584 = vld [vmem:[#allocation7 + $0x8] sm:$0xff]
        %v585 = vmul.f32 %v580, %v581
        %vm586 = vcmask 130048
        %v588 = vsel %vm586, %v580, 0
        %590 = vmatprep.subr.mxu0 0.0
        %591 = vmatpush1.msra.mxu0 0.0
        %592 = vmatprep.subr.mxu0 0.0
        %593 = vmatpush1.msra.mxu0 0.0
        %594 = vmatprep.subr.mxu0 0.0
        %595 = vmatpush1.msra.mxu0 0.0
        %596 = vmatprep.subr.mxu0 0.0
        %597 = vmatpush1.msra.mxu0 0.0
        %598 = vmatprep.subr.mxu0 0.0
        %599 = vmatpush1.msra.mxu0 0.0
        %600 = vmatprep.subr.mxu0 0.0
        %601 = vmatpush1.msra.mxu0 0.0
        %602 = vmatprep.subr.mxu0 0.0
        %603 = vmatpush1.msra.mxu0 0.0
        %604 = vmatprep.subr.mxu0 0.0
        %605 = vmatpush1.msra.mxu0 0.0
        %606 = vmatprep.subr.mxu0 0.0
        %607 = vmatpush1.msra.mxu0 0.0
        %608 = vmatprep.subr.mxu0 0.0
        %609 = vmatpush1.msra.mxu0 0.0
        %610 = vmatprep.subr.mxu0 0.0
        %611 = vmatpush1.msra.mxu0 0.0
        %612 = vmatprep.subr.mxu0 0.0
        %613 = vmatpush1.msra.mxu0 0.0
        %614 = vmatprep.subr.mxu0 0.0
        %615 = vmatpush1.msra.mxu0 0.0
        %616 = vmatprep.subr.mxu0 0.0
        %617 = vmatpush1.msra.mxu0 0.0
        %618 = vmatprep.subr.mxu0 0.0
        %619 = vmatpush1.msra.mxu0 %v584
        %620 = vmatprep.subr.mxu0 0.0
        %621 = vmatpush1.msra.mxu0 %v583
        %622 = vmatprep.subr.mxu0 0.0
        %623 = vmatpush2.msra.mxu0 0.0
        %624 = vmatprep.subr.mxu0 0.0
        %625 = vmatpush2.msra.mxu0 0.0
        %626 = vmatprep.subr.mxu0 0.0
        %627 = vmatpush2.msra.mxu0 0.0
        %628 = vmatprep.subr.mxu0 0.0
        %629 = vmatpush2.msra.mxu0 0.0
        %630 = vmatprep.subr.mxu0 0.0
        %631 = vmatpush2.msra.mxu0 0.0
        %632 = vmatprep.subr.mxu0 0.0
        %633 = vmatpush2.msra.mxu0 0.0
        %634 = vmatprep.subr.mxu0 0.0
        %635 = vmatpush2.msra.mxu0 0.0
        %636 = vmatprep.subr.mxu0 0.0
        %637 = vmatpush2.msra.mxu0 0.0
        %638 = vmatprep.subr.mxu0 0.0
        %639 = vmatpush2.msra.mxu0 0.0
        %640 = vmatprep.subr.mxu0 0.0
        %641 = vmatpush2.msra.mxu0 0.0
        %642 = vmatprep.subr.mxu0 0.0
        %643 = vmatpush2.msra.mxu0 0.0
        %644 = vmatprep.subr.mxu0 0.0
        %645 = vmatpush2.msra.mxu0 0.0
        %646 = vmatprep.subr.mxu0 0.0
        %647 = vmatpush2.msra.mxu0 0.0
        %648 = vmatprep.subr.mxu0 0.0
        %649 = vmatpush2.msra.mxu0 0.0
        %650 = vmatprep.subr.mxu0 0.0
        %651 = vmatpush2.msra.mxu0 0.0
        %652 = vmatprep.subr.mxu0 0.0
        %653 = vmatpush2.msra.mxu0 0.0
        %654 = vmatprep.mubr.f32.mxu0 0.0
        %655 = vmatmul.mubr.f32.gmra.mxu0 %v588
        %v656 = vpop.f32.mrf.mxu0
        %v657 = vadd.f32 0.0, %v656
        %v658 = vpop.f32.mrf.mxu0
        %659 = vdwg.mxu0
        %v660 = vmul.f32 %v657, %v582
        %v661 = vadd.f32 %v585, %v660
        %663 = vrot.lane.b32.xlu0 %v581, 32
        %v664 = vpop.permute.xlu0 %663
        %v666 = vmul.f32 %v575, %v664
        %668 = vrot.lane.b32.xlu0 %v575, 96
        %v669 = vpop.permute.xlu0 %668
        %v670 = vsel %vm586, %v669, 0
        %672 = vmatprep.subr.mxu0 0.0
        %673 = vmatpush1.msra.mxu0 0.0
        %674 = vmatprep.subr.mxu0 0.0
        %675 = vmatpush1.msra.mxu0 0.0
        %676 = vmatprep.subr.mxu0 0.0
        %677 = vmatpush1.msra.mxu0 0.0
        %678 = vmatprep.subr.mxu0 0.0
        %679 = vmatpush1.msra.mxu0 0.0
        %680 = vmatprep.subr.mxu0 0.0
        %681 = vmatpush1.msra.mxu0 0.0
        %682 = vmatprep.subr.mxu0 0.0
        %683 = vmatpush1.msra.mxu0 0.0
        %684 = vmatprep.subr.mxu0 0.0
        %685 = vmatpush1.msra.mxu0 0.0
        %686 = vmatprep.subr.mxu0 0.0
        %687 = vmatpush1.msra.mxu0 0.0
        %688 = vmatprep.subr.mxu0 0.0
        %689 = vmatpush1.msra.mxu0 0.0
        %690 = vmatprep.subr.mxu0 0.0
        %691 = vmatpush1.msra.mxu0 0.0
        %692 = vmatprep.subr.mxu0 0.0
        %693 = vmatpush1.msra.mxu0 0.0
        %694 = vmatprep.subr.mxu0 0.0
        %695 = vmatpush1.msra.mxu0 0.0
        %696 = vmatprep.subr.mxu0 0.0
        %697 = vmatpush1.msra.mxu0 0.0
        %698 = vmatprep.subr.mxu0 0.0
        %699 = vmatpush1.msra.mxu0 0.0
        %700 = vmatprep.subr.mxu0 0.0
        %701 = vmatpush1.msra.mxu0 %v584
        %702 = vmatprep.subr.mxu0 0.0
        %703 = vmatpush1.msra.mxu0 %v583
        %704 = vmatprep.subr.mxu0 0.0
        %705 = vmatpush2.msra.mxu0 0.0
        %706 = vmatprep.subr.mxu0 0.0
        %707 = vmatpush2.msra.mxu0 0.0
        %708 = vmatprep.subr.mxu0 0.0
        %709 = vmatpush2.msra.mxu0 0.0
        %710 = vmatprep.subr.mxu0 0.0
        %711 = vmatpush2.msra.mxu0 0.0
        %712 = vmatprep.subr.mxu0 0.0
        %713 = vmatpush2.msra.mxu0 0.0
        %714 = vmatprep.subr.mxu0 0.0
        %715 = vmatpush2.msra.mxu0 0.0
        %716 = vmatprep.subr.mxu0 0.0
        %717 = vmatpush2.msra.mxu0 0.0
        %718 = vmatprep.subr.mxu0 0.0
        %719 = vmatpush2.msra.mxu0 0.0
        %720 = vmatprep.subr.mxu0 0.0
        %721 = vmatpush2.msra.mxu0 0.0
        %722 = vmatprep.subr.mxu0 0.0
        %723 = vmatpush2.msra.mxu0 0.0
        %724 = vmatprep.subr.mxu0 0.0
        %725 = vmatpush2.msra.mxu0 0.0
        %726 = vmatprep.subr.mxu0 0.0
        %727 = vmatpush2.msra.mxu0 0.0
        %728 = vmatprep.subr.mxu0 0.0
        %729 = vmatpush2.msra.mxu0 0.0
        %730 = vmatprep.subr.mxu0 0.0
        %731 = vmatpush2.msra.mxu0 0.0
        %732 = vmatprep.subr.mxu0 0.0
        %733 = vmatpush2.msra.mxu0 0.0
        %734 = vmatprep.subr.mxu0 0.0
        %735 = vmatpush2.msra.mxu0 0.0
        %736 = vmatprep.mubr.f32.mxu0 0.0
        %737 = vmatmul.mubr.f32.gmra.mxu0 %v670
        %v738 = vpop.f32.mrf.mxu0
        %v739 = vadd.f32 0.0, %v738
        %v740 = vpop.f32.mrf.mxu0
        %741 = vdwg.mxu0
        %v742 = vmul.f32 %v739, %v582
        %744 = vrot.lane.b32.xlu0 %v742, 32
        %v745 = vpop.permute.xlu0 %744
        %v747 = vadd.f32 %v666, %v745
        %v748 = vpack.c.bf16 %v661, %v661
        %vm749 = vcmask 125952
        %750 = vst.msk [vmem:[%s468] sm:$0xf] %vm749, %v748
        %v751 = vpack.c.bf16 %v747, %v747
        %v753 = vunpack.c.l.b16 %v751
        %v754 = vpack.c.b16 %v753, %v753
        %755 = vrot.lane.b32.xlu0 %v754, 96
        %v756 = vpop.permute.xlu0 %755
        %758 = vst.msk [vmem:[%s475] sm:$0xf] %vm749, %v756
        %v759 = vpack.c.bf16 %v575, %v575
        %v761 = vunpack.c.l.b16 %v759
        %v762 = vpack.c.b16 %v761, %v761
        %763 = vrot.lane.b32.xlu0 %v762, 64
        %v764 = vpop.permute.xlu0 %763
        %766 = vst.msk [vmem:[%s482] sm:$0xf] %vm749, %v764
        %768 = vst.msk [vmem:[%s489] sm:$0xff] %vm586, %v669
        %769 = vrot.lane.b32.xlu0 %v575, 64
        %v770 = vpop.permute.xlu0 %769
        %772 = vst.msk [vmem:[%s496] sm:$0xff] %vm586, %v770
        %773 = vrot.lane.b32.xlu0 %v581, 16
        %v774 = vpop.permute.xlu0 %773
        %v776 = vmul.f32 %v580, %v774
        %777 = vrot.lane.b32.xlu0 %v580, 112
        %v778 = vpop.permute.xlu0 %777
        %v779 = vsel %vm586, %v778, 0
        %781 = vmatprep.subr.mxu0 0.0
        %782 = vmatpush1.msra.mxu0 0.0
        %783 = vmatprep.subr.mxu0 0.0
        %784 = vmatpush1.msra.mxu0 0.0
        %785 = vmatprep.subr.mxu0 0.0
        %786 = vmatpush1.msra.mxu0 0.0
        %787 = vmatprep.subr.mxu0 0.0
        %788 = vmatpush1.msra.mxu0 0.0
        %789 = vmatprep.subr.mxu0 0.0
        %790 = vmatpush1.msra.mxu0 0.0
        %791 = vmatprep.subr.mxu0 0.0
        %792 = vmatpush1.msra.mxu0 0.0
        %793 = vmatprep.subr.mxu0 0.0
        %794 = vmatpush1.msra.mxu0 0.0
        %795 = vmatprep.subr.mxu0 0.0
        %796 = vmatpush1.msra.mxu0 0.0
        %797 = vmatprep.subr.mxu0 0.0
        %798 = vmatpush1.msra.mxu0 0.0
        %799 = vmatprep.subr.mxu0 0.0
        %800 = vmatpush1.msra.mxu0 0.0
        %801 = vmatprep.subr.mxu0 0.0
        %802 = vmatpush1.msra.mxu0 0.0
        %803 = vmatprep.subr.mxu0 0.0
        %804 = vmatpush1.msra.mxu0 0.0
        %805 = vmatprep.subr.mxu0 0.0
        %806 = vmatpush1.msra.mxu0 0.0
        %807 = vmatprep.subr.mxu0 0.0
        %808 = vmatpush1.msra.mxu0 0.0
        %809 = vmatprep.subr.mxu0 0.0
        %810 = vmatpush1.msra.mxu0 %v584
        %811 = vmatprep.subr.mxu0 0.0
        %812 = vmatpush1.msra.mxu0 %v583
        %813 = vmatprep.subr.mxu0 0.0
        %814 = vmatpush2.msra.mxu0 0.0
        %815 = vmatprep.subr.mxu0 0.0
        %816 = vmatpush2.msra.mxu0 0.0
        %817 = vmatprep.subr.mxu0 0.0
        %818 = vmatpush2.msra.mxu0 0.0
        %819 = vmatprep.subr.mxu0 0.0
        %820 = vmatpush2.msra.mxu0 0.0
        %821 = vmatprep.subr.mxu0 0.0
        %822 = vmatpush2.msra.mxu0 0.0
        %823 = vmatprep.subr.mxu0 0.0
        %824 = vmatpush2.msra.mxu0 0.0
        %825 = vmatprep.subr.mxu0 0.0
        %826 = vmatpush2.msra.mxu0 0.0
        %827 = vmatprep.subr.mxu0 0.0
        %828 = vmatpush2.msra.mxu0 0.0
        %829 = vmatprep.subr.mxu0 0.0
        %830 = vmatpush2.msra.mxu0 0.0
        %831 = vmatprep.subr.mxu0 0.0
        %832 = vmatpush2.msra.mxu0 0.0
        %833 = vmatprep.subr.mxu0 0.0
        %834 = vmatpush2.msra.mxu0 0.0
        %835 = vmatprep.subr.mxu0 0.0
        %836 = vmatpush2.msra.mxu0 0.0
        %837 = vmatprep.subr.mxu0 0.0
        %838 = vmatpush2.msra.mxu0 0.0
        %839 = vmatprep.subr.mxu0 0.0
        %840 = vmatpush2.msra.mxu0 0.0
        %841 = vmatprep.subr.mxu0 0.0
        %842 = vmatpush2.msra.mxu0 0.0
        %843 = vmatprep.subr.mxu0 0.0
        %844 = vmatpush2.msra.mxu0 0.0
        %845 = vmatprep.mubr.f32.mxu0 0.0
        %846 = vmatmul.mubr.f32.gmra.mxu0 %v779
        %v847 = vpop.f32.mrf.mxu0
        %v848 = vadd.f32 0.0, %v847
        %v849 = vpop.f32.mrf.mxu0
        %850 = vdwg.mxu0
        %v851 = vmul.f32 %v848, %v582
        %853 = vrot.lane.b32.xlu0 %v851, 16
        %v854 = vpop.permute.xlu0 %853
        %v856 = vadd.f32 %v776, %v854
        %857 = vrot.lane.b32.xlu0 %v581, 48
        %v858 = vpop.permute.xlu0 %857
        %v860 = vmul.f32 %v575, %v858
        %861 = vrot.lane.b32.xlu0 %v575, 80
        %v862 = vpop.permute.xlu0 %861
        %v863 = vsel %vm586, %v862, 0
        %865 = vmatprep.subr.mxu0 0.0
        %866 = vmatpush1.msra.mxu0 0.0
        %867 = vmatprep.subr.mxu0 0.0
        %868 = vmatpush1.msra.mxu0 0.0
        %869 = vmatprep.subr.mxu0 0.0
        %870 = vmatpush1.msra.mxu0 0.0
        %871 = vmatprep.subr.mxu0 0.0
        %872 = vmatpush1.msra.mxu0 0.0
        %873 = vmatprep.subr.mxu0 0.0
        %874 = vmatpush1.msra.mxu0 0.0
        %875 = vmatprep.subr.mxu0 0.0
        %876 = vmatpush1.msra.mxu0 0.0
        %877 = vmatprep.subr.mxu0 0.0
        %878 = vmatpush1.msra.mxu0 0.0
        %879 = vmatprep.subr.mxu0 0.0
        %880 = vmatpush1.msra.mxu0 0.0
        %881 = vmatprep.subr.mxu0 0.0
        %882 = vmatpush1.msra.mxu0 0.0
        %883 = vmatprep.subr.mxu0 0.0
        %884 = vmatpush1.msra.mxu0 0.0
        %885 = vmatprep.subr.mxu0 0.0
        %886 = vmatpush1.msra.mxu0 0.0
        %887 = vmatprep.subr.mxu0 0.0
        %888 = vmatpush1.msra.mxu0 0.0
        %889 = vmatprep.subr.mxu0 0.0
        %890 = vmatpush1.msra.mxu0 0.0
        %891 = vmatprep.subr.mxu0 0.0
        %892 = vmatpush1.msra.mxu0 0.0
        %893 = vmatprep.subr.mxu0 0.0
        %894 = vmatpush1.msra.mxu0 %v584
        %895 = vmatprep.subr.mxu0 0.0
        %896 = vmatpush1.msra.mxu0 %v583
        %897 = vmatprep.subr.mxu0 0.0
        %898 = vmatpush2.msra.mxu0 0.0
        %899 = vmatprep.subr.mxu0 0.0
        %900 = vmatpush2.msra.mxu0 0.0
        %901 = vmatprep.subr.mxu0 0.0
        %902 = vmatpush2.msra.mxu0 0.0
        %903 = vmatprep.subr.mxu0 0.0
        %904 = vmatpush2.msra.mxu0 0.0
        %905 = vmatprep.subr.mxu0 0.0
        %906 = vmatpush2.msra.mxu0 0.0
        %907 = vmatprep.subr.mxu0 0.0
        %908 = vmatpush2.msra.mxu0 0.0
        %909 = vmatprep.subr.mxu0 0.0
        %910 = vmatpush2.msra.mxu0 0.0
        %911 = vmatprep.subr.mxu0 0.0
        %912 = vmatpush2.msra.mxu0 0.0
        %913 = vmatprep.subr.mxu0 0.0
        %914 = vmatpush2.msra.mxu0 0.0
        %915 = vmatprep.subr.mxu0 0.0
        %916 = vmatpush2.msra.mxu0 0.0
        %917 = vmatprep.subr.mxu0 0.0
        %918 = vmatpush2.msra.mxu0 0.0
        %919 = vmatprep.subr.mxu0 0.0
        %920 = vmatpush2.msra.mxu0 0.0
        %921 = vmatprep.subr.mxu0 0.0
        %922 = vmatpush2.msra.mxu0 0.0
        %923 = vmatprep.subr.mxu0 0.0
        %924 = vmatpush2.msra.mxu0 0.0
        %925 = vmatprep.subr.mxu0 0.0
        %926 = vmatpush2.msra.mxu0 0.0
        %927 = vmatprep.subr.mxu0 0.0
        %928 = vmatpush2.msra.mxu0 0.0
        %929 = vmatprep.mubr.f32.mxu0 0.0
        %930 = vmatmul.mubr.f32.gmra.mxu0 %v863
        %v931 = vpop.f32.mrf.mxu0
        %v932 = vadd.f32 0.0, %v931
        %v933 = vpop.f32.mrf.mxu0
        %934 = vdwg.mxu0
        %v935 = vmul.f32 %v932, %v582
        %937 = vrot.lane.b32.xlu0 %v935, 48
        %v938 = vpop.permute.xlu0 %937
        %v940 = vadd.f32 %v860, %v938
        %v941 = vpack.c.bf16 %v856, %v856
        %v943 = vunpack.c.l.b16 %v941
        %v944 = vpack.c.b16 %v943, %v943
        %945 = vrot.lane.b32.xlu0 %v944, 112
        %v946 = vpop.permute.xlu0 %945
        %s948 = scalar_lea.vmem %s468, 4 [#allocation10]
        %949 = vst.msk [vmem:[%s948] sm:$0xf] %vm749, %v946
        %v950 = vpack.c.bf16 %v940, %v940
        %v952 = vunpack.c.l.b16 %v950
        %v953 = vpack.c.b16 %v952, %v952
        %954 = vrot.lane.b32.xlu0 %v953, 80
        %v955 = vpop.permute.xlu0 %954
        %s957 = scalar_lea.vmem %s475, 4 [#allocation11]
        %958 = vst.msk [vmem:[%s957] sm:$0xf] %vm749, %v955
        %959 = vrot.lane.b32.xlu0 %v762, 48
        %v960 = vpop.permute.xlu0 %959
        %s962 = scalar_lea.vmem %s482, 4 [#allocation13]
        %963 = vst.msk [vmem:[%s962] sm:$0xf] %vm749, %v960
        %s965 = scalar_lea.vmem %s489, 8 [#allocation14]
        %966 = vst.msk [vmem:[%s965] sm:$0xff] %vm586, %v862
        %967 = vrot.lane.b32.xlu0 %v575, 48
        %v968 = vpop.permute.xlu0 %967
        %s970 = scalar_lea.vmem %s496, 8 [#allocation16]
        %971 = vst.msk [vmem:[%s970] sm:$0xff] %vm586, %v968
        %s972 = sand.u32 %s201, 1
        %s973 = scalar_lea.sflag [#allocation4], %s972
        %s974 = sand.u32 %s201, 1
        %s975 = smul.addr %s974, 8
        %s976 = scalar_lea.vmem [#allocation10], %s975
        %s977 = sand.u32 %s36, 1
        %s978 = scalar_lea.sflag [#allocation12], %s977
        %s979 = sand.u32 %s229, 1
        %s980 = smul.addr %s979, 8
        %s981 = scalar_lea.vmem [#allocation11], %s980
        %s982 = sand.u32 %s36, 1
        %s983 = scalar_lea.sflag [#allocation12], %s982
        %s984 = sand.u32 %s257, 1
        %s985 = smul.addr %s984, 8
        %s986 = scalar_lea.vmem [#allocation13], %s985
        %s987 = sand.u32 %s36, 1
        %s988 = scalar_lea.sflag [#allocation15], %s987
        %s989 = sand.u32 %s285, 1
        %s990 = smul.addr %s989, 16
        %s991 = scalar_lea.vmem [#allocation14], %s990
        %s992 = sand.u32 %s36, 1
        %s993 = scalar_lea.sflag [#allocation15], %s992
        %s994 = sand.u32 %s313, 1
        %s995 = smul.addr %s994, 16
        %s996 = scalar_lea.vmem [#allocation16], %s995
        // Predicated region
        $region61: #{tpu_custom_call.1} parent=43 // pred_check
          %p997 = pneg %p211
        $region62: #{tpu_custom_call.1} parent=43 // pred_check_branch
          %999 = sbr.rel (%p997) target = $region64
        $region63: #{tpu_custom_call.1} parent=43 // pred_region
          %s1001 = ssub.s32 128, 128
          %1002 = vsyncadd %s973, %s1001
          %s1003 = smul.addr %s40, 2
          %s1004 = sadd.s32 %s41, %s1003
          %s1005 = smul.addr %s1004, 64
          %s1006 = scalar_lea.hbm %s6, %s1005
          %s1007 = sshll.u32 %s976, 4
          %s1008 = int_to_ptr.vmem [resolvable:$true] %s1007
          %1013 = dma.vmem_to_hbm [thread:$0]  %s1008, 128, %s1006, %s973, 64, 64, 4
        $region64: #{tpu_custom_call.1} parent=43 // pred_fallthru
          _
        // Predicated region
        $region65: #{tpu_custom_call.1} parent=43 // pred_check
          %p1014 = pneg %p239
        $region66: #{tpu_custom_call.1} parent=43 // pred_check_branch
          %1016 = sbr.rel (%p1014) target = $region68
        $region67: #{tpu_custom_call.1} parent=43 // pred_region
          %s1018 = ssub.s32 128, 128
          %1019 = vsyncadd %s978, %s1018
          %s1020 = smul.addr %s40, 2
          %s1021 = sadd.s32 %s41, %s1020
          %s1022 = smul.addr %s1021, 64
          %s1023 = scalar_lea.hbm %s7, %s1022
          %s1024 = sshll.u32 %s981, 4
          %s1025 = int_to_ptr.vmem [resolvable:$true] %s1024
          %1030 = dma.vmem_to_hbm [thread:$0]  %s1025, 128, %s1023, %s978, 64, 64, 4
        $region68: #{tpu_custom_call.1} parent=43 // pred_fallthru
          _
        // Predicated region
        $region69: #{tpu_custom_call.1} parent=43 // pred_check
          %p1031 = pneg %p267
        $region70: #{tpu_custom_call.1} parent=43 // pred_check_branch
          %1033 = sbr.rel (%p1031) target = $region72
        $region71: #{tpu_custom_call.1} parent=43 // pred_region
          %s1035 = ssub.s32 128, 128
          %1036 = vsyncadd %s983, %s1035
          %s1037 = smul.addr %s40, 2
          %s1038 = sadd.s32 %s41, %s1037
          %s1039 = smul.addr %s1038, 64
          %s1040 = scalar_lea.hbm %s8, %s1039
          %s1041 = sshll.u32 %s986, 4
          %s1042 = int_to_ptr.vmem [resolvable:$true] %s1041
          %1047 = dma.vmem_to_hbm [thread:$0]  %s1042, 128, %s1040, %s983, 64, 64, 4
        $region72: #{tpu_custom_call.1} parent=43 // pred_fallthru
          _
        // Predicated region
        $region73: #{tpu_custom_call.1} parent=43 // pred_check
          %p1048 = pneg %p295
        $region74: #{tpu_custom_call.1} parent=43 // pred_check_branch
          %1050 = sbr.rel (%p1048) target = $region76
        $region75: #{tpu_custom_call.1} parent=43 // pred_region
          %s1052 = ssub.s32 256, 256
          %1053 = vsyncadd %s988, %s1052
          %s1054 = smul.addr %s40, 2
          %s1055 = sadd.s32 %s41, %s1054
          %s1056 = smul.addr %s1055, 128
          %s1057 = scalar_lea.hbm %s9, %s1056
          %s1058 = sshll.u32 %s991, 4
          %s1059 = int_to_ptr.vmem [resolvable:$true] %s1058
          %1064 = dma.vmem_to_hbm [thread:$0]  %s1059, 256, %s1057, %s988, 128, 128, 8
        $region76: #{tpu_custom_call.1} parent=43 // pred_fallthru
          _
        // Predicated region
        $region77: #{tpu_custom_call.1} parent=43 // pred_check
          %p1065 = pneg %p323
        $region78: #{tpu_custom_call.1} parent=43 // pred_check_branch
          %1067 = sbr.rel (%p1065) target = $region80
        $region79: #{tpu_custom_call.1} parent=43 // pred_region
          %s1069 = ssub.s32 256, 256
          %1070 = vsyncadd %s993, %s1069
          %s1071 = smul.addr %s40, 2
          %s1072 = sadd.s32 %s41, %s1071
          %s1073 = smul.addr %s1072, 128
          %s1074 = scalar_lea.hbm %s10, %s1073
          %s1075 = sshll.u32 %s996, 4
          %s1076 = int_to_ptr.vmem [resolvable:$true] %s1075
          %1081 = dma.vmem_to_hbm [thread:$0]  %s1076, 256, %s1074, %s993, 128, 128, 8
        $region80: #{tpu_custom_call.1} parent=43 // pred_fallthru
          _
      $region44: #{tpu_custom_call.1} parent=5 // pred_fallthru
        _
      %p1082 = scmp.le.s32.totalorder 2, %s31
      // Predicated region
      $region81: #{tpu_custom_call.1} parent=5 // pred_check
        %p1083 = pneg %p1082
      $region82: #{tpu_custom_call.1} parent=5 // pred_check_branch
        %1085 = sbr.rel (%p1083) target = $region84
      $region83: #{tpu_custom_call.1} parent=5 // pred_region
        %s1086 = ssub.s32 %s31, 2
        // Predicated region
        $region85: #{tpu_custom_call.1} parent=83 // pred_check
          %p1087 = pneg %p217
        $region86: #{tpu_custom_call.1} parent=83 // pred_check_branch
          %1089 = sbr.rel (%p1087) target = $region88
        $region87: #{tpu_custom_call.1} parent=83 // pred_region
          %s1090 = sand.u32 %s202, 1
          %s1091 = scalar_lea.sflag [#allocation4], %s1090
          %s1092 = sand.u32 %s202, 1
          %s1093 = smul.addr %s1092, 8
          %s1094 = scalar_lea.vmem [#allocation10], %s1093
          %1095 = dma.done %s1091, 128
        $region88: #{tpu_custom_call.1} parent=83 // pred_fallthru
          _
        // Predicated region
        $region89: #{tpu_custom_call.1} parent=83 // pred_check
          %p1096 = pneg %p245
        $region90: #{tpu_custom_call.1} parent=83 // pred_check_branch
          %1098 = sbr.rel (%p1096) target = $region92
        $region91: #{tpu_custom_call.1} parent=83 // pred_region
          %s1099 = sand.u32 %s37, 1
          %s1100 = scalar_lea.sflag [#allocation12], %s1099
          %s1101 = sand.u32 %s230, 1
          %s1102 = smul.addr %s1101, 8
          %s1103 = scalar_lea.vmem [#allocation11], %s1102
          %1104 = dma.done %s1100, 128
        $region92: #{tpu_custom_call.1} parent=83 // pred_fallthru
          _
        // Predicated region
        $region93: #{tpu_custom_call.1} parent=83 // pred_check
          %p1105 = pneg %p273
        $region94: #{tpu_custom_call.1} parent=83 // pred_check_branch
          %1107 = sbr.rel (%p1105) target = $region96
        $region95: #{tpu_custom_call.1} parent=83 // pred_region
          %s1108 = sand.u32 %s37, 1
          %s1109 = scalar_lea.sflag [#allocation12], %s1108
          %s1110 = sand.u32 %s258, 1
          %s1111 = smul.addr %s1110, 8
          %s1112 = scalar_lea.vmem [#allocation13], %s1111
          %1113 = dma.done %s1109, 128
        $region96: #{tpu_custom_call.1} parent=83 // pred_fallthru
          _
        // Predicated region
        $region97: #{tpu_custom_call.1} parent=83 // pred_check
          %p1114 = pneg %p301
        $region98: #{tpu_custom_call.1} parent=83 // pred_check_branch
          %1116 = sbr.rel (%p1114) target = $region100
        $region99: #{tpu_custom_call.1} parent=83 // pred_region
          %s1117 = sand.u32 %s37, 1
          %s1118 = scalar_lea.sflag [#allocation15], %s1117
          %s1119 = sand.u32 %s286, 1
          %s1120 = smul.addr %s1119, 16
          %s1121 = scalar_lea.vmem [#allocation14], %s1120
          %1122 = dma.done %s1118, 256
        $region100: #{tpu_custom_call.1} parent=83 // pred_fallthru
          _
        // Predicated region
        $region101: #{tpu_custom_call.1} parent=83 // pred_check
          %p1123 = pneg %p329
        $region102: #{tpu_custom_call.1} parent=83 // pred_check_branch
          %1125 = sbr.rel (%p1123) target = $region104
        $region103: #{tpu_custom_call.1} parent=83 // pred_region
          %s1126 = sand.u32 %s37, 1
          %s1127 = scalar_lea.sflag [#allocation15], %s1126
          %s1128 = sand.u32 %s314, 1
          %s1129 = smul.addr %s1128, 16
          %s1130 = scalar_lea.vmem [#allocation16], %s1129
          %1131 = dma.done %s1127, 256
        $region104: #{tpu_custom_call.1} parent=83 // pred_fallthru
          _
      $region84: #{tpu_custom_call.1} parent=5 // pred_fallthru
        _
    $region6: #{tpu_custom_call.1} parent=1 // loop_footer
      %s35 = sadd.s32 1, %s31
    $region7: #{tpu_custom_call.1} parent=1 // loop_footer_branch
      %30 = sbr.rel target = $region3
    $region8: #{tpu_custom_call.1} parent=1 // loop_exit
      _
    %1132 = vsyncpa [#allocation3], 1
    %s1133 = scalar_lea.sflag [#allocation3], 1
    %1134 = vsyncpa %s1133, 1
    %1135 = vsyncpa [#allocation6], 1
    %1136 = vsyncpa [#allocation9], 1
    %1137 = vsyncpa [#allocation4], 1
    %s1138 = scalar_lea.sflag [#allocation4], 1
    %1139 = vsyncpa %s1138, 1
    %1140 = vsyncpa [#allocation12], 1
    %s1141 = scalar_lea.sflag [#allocation12], 1
    %1142 = vsyncpa %s1141, 1
    %1143 = vsyncpa [#allocation15], 1
    %s1144 = scalar_lea.sflag [#allocation15], 1
    %1145 = vsyncpa %s1144, 1

</llo_original>
